<compile_context>
chip_gen: v7x
topology: tpu7x:2x2x1
jax: 0.10.0
libtpu: 0.0.40
codegen_flags: <defaults>
</compile_context>

<pallas_src>
import jax
import jax.numpy as jnp
import numpy as np
from jax.experimental import pallas as pl
from jax.experimental.pallas import tpu as pltpu

BN_EPS = 1e-5
NEG_FILL = -1e30   # bias for padded class lanes -> exp() underflows to 0 in log_softmax


def _gnn_kernel(x_ref, adj_ref, pool_ref,
                w1_ref, b1_ref, w2_ref, b2_ref,
                w3_ref, b3_ref, w4_ref, b4_ref,
                out_ref):
    f32, bf16 = jnp.float32, jnp.bfloat16
    Gb, N, Dp = x_ref.shape
    B = pool_ref.shape[1]
    Hp = w1_ref.shape[1]
    Cp = w4_ref.shape[1]

    adj = adj_ref[...]                                    # [Gb, N, N]   bf16

    # ---- layer 1: relu(adj @ (x @ W1 + b1)) ---------------------------------
    x2 = x_ref[...].reshape(Gb * N, Dp)                   # [Gb*N, Dp]   bf16
    h = jnp.dot(x2, w1_ref[...], preferred_element_type=f32) + b1_ref[...]
    h = jnp.einsum('gij,gjh->gih', adj, h.reshape(Gb, N, Hp).astype(bf16),
                   preferred_element_type=f32)
    h = jnp.maximum(h, 0.0)                               # [Gb, N, Hp]  f32
    # dropout: identity (eval mode)
    # TODO(synk): training-mode stochastic dropout not implemented.

    # ---- layer 2: relu(adj @ (h @ W2 + b2)) ---------------------------------
    h = jnp.dot(h.reshape(Gb * N, Hp).astype(bf16), w2_ref[...],
                preferred_element_type=f32) + b2_ref[...]
    h = jnp.einsum('gij,gjh->gih', adj, h.reshape(Gb, N, Hp).astype(bf16),
                   preferred_element_type=f32)
    h = jnp.maximum(h, 0.0)                               # [Gb, N, Hp]  f32

    # ---- sum pooling (scatter_add) as one-hot matmul on the MXU -------------
    pooled = jnp.einsum('gbn,gnh->gbh', pool_ref[...], h.astype(bf16),
                        preferred_element_type=f32)       # [Gb, B, Hp]  f32

    # ---- fc3 (BatchNorm folded in) + relu, dropout identity, fc4 ------------
    p2 = pooled.reshape(Gb * B, Hp).astype(bf16)
    z = jnp.maximum(jnp.dot(p2, w3_ref[...], preferred_element_type=f32)
                    + b3_ref[...], 0.0)
    logits = (jnp.dot(z.astype(bf16), w4_ref[...], preferred_element_type=f32)
              + b4_ref[...])                              # [Gb*B, Cp]   f32

    # ---- log_softmax over classes (f32; padded lanes carry -1e30 bias) ------
    m = jnp.max(logits, axis=1, keepdims=True)
    zz = logits - m
    lse = jnp.log(jnp.sum(jnp.exp(zz), axis=1, keepdims=True))
    out_ref[...] = (zz - lse).reshape(Gb, B, Cp)


def gnn_forward_batched(x_pad, adj, pool, params, n_class, *, graphs_per_step=4):
    """x_pad: [G,N,Dp] bf16, adj: [G,N,N] bf16, pool: [G,B,N] bf16.

    Weights w1..w4 are bf16, biases b1..b4 f32 (b4 padded classes carry -1e30).
    Returns f32 log-probabilities [G, B, n_class].
    """
    G, N, Dp = x_pad.shape
    B = pool.shape[1]
    Hp = params["w1"].shape[1]
    Cp = params["w4"].shape[1]

    Gb = min(graphs_per_step, G)
    assert G % Gb == 0, "number of graph-batches must be divisible by graphs_per_step"
    steps = G // Gb

    args = (x_pad, adj, pool,
            params["w1"], params["b1"], params["w2"], params["b2"],
            params["w3"], params["b3"], params["w4"], params["b4"])

    in_specs = [
        pl.BlockSpec((Gb, N, Dp), lambda g: (g, 0, 0)),   # x  (bf16, padded features)
        pl.BlockSpec((Gb, N, N), lambda g: (g, 0, 0)),    # adj (bf16)
        pl.BlockSpec((Gb, B, N), lambda g: (g, 0, 0)),    # one-hot pooling matrix (bf16)
        pl.BlockSpec((Dp, Hp), lambda g: (0, 0)),         # w1 (bf16, shared)
        pl.BlockSpec((1, Hp), lambda g: (0, 0)),          # b1 (f32)
        pl.BlockSpec((Hp, Hp), lambda g: (0, 0)),         # w2
        pl.BlockSpec((1, Hp), lambda g: (0, 0)),          # b2
        pl.BlockSpec((Hp, Hp), lambda g: (0, 0)),         # w3 (BN folded)
        pl.BlockSpec((1, Hp), lambda g: (0, 0)),          # b3 (BN folded)
        pl.BlockSpec((Hp, Cp), lambda g: (0, 0)),         # w4
        pl.BlockSpec((1, Cp), lambda g: (0, 0)),          # b4 (padded classes = -1e30)
    ]

    flops_per_graph = 2 * (N * Dp * Hp + N * N * Hp + N * Hp * Hp + N * N * Hp
                           + B * N * Hp + B * Hp * Hp + B * Hp * Cp)
    bytes_accessed = sum(int(np.prod(a.shape)) * a.dtype.itemsize for a in args) \
        + G * B * Cp * 4
    cost = pl.CostEstimate(flops=int(G * flops_per_graph),
                           transcendentals=int(G * B * (Cp + 1)),
                           bytes_accessed=int(bytes_accessed))

    out = pl.pallas_call(
        _gnn_kernel,
        out_shape=jax.ShapeDtypeStruct((G, B, Cp), jnp.float32),
        grid=(steps,),
        in_specs=in_specs,
        out_specs=pl.BlockSpec((Gb, B, Cp), lambda g: (g, 0, 0)),
        compiler_params=pltpu.CompilerParams(
            dimension_semantics=("parallel",),
            vmem_limit_bytes=32 * 1024 * 1024),
        cost_estimate=cost,
    )(*args)
    return out[:, :, :n_class]


# ----------------------------- host-side helpers -----------------------------

def _linear_params(key, fan_in, fan_out):
    # torch.nn.Linear default init: U(-1/sqrt(fan_in), 1/sqrt(fan_in)); stored [in, out].
    kw, kb = jax.random.split(key)
    bound = 1.0 / np.sqrt(fan_in)
    w = jax.random.uniform(kw, (fan_in, fan_out), jnp.float32, -bound, bound)
    b = jax.random.uniform(kb, (fan_out,), jnp.float32, -bound, bound)
    return w, b


def _fold_bn_into_linear(w, b, gamma, beta, rmean, rvar, eps=BN_EPS):
    # bn(p) @ W + b == p @ (scale[:,None]*W) + ((beta - rmean*scale) @ W + b)
    scale = gamma / jnp.sqrt(rvar + eps)
    shift = beta - rmean * scale
    return scale[:, None] * w, b + shift @ w


def _pad2(a, rows, cols, fill=0.0):
    out = jnp.full((rows, cols), fill, a.dtype)
    return out.at[:a.shape[0], :a.shape[1]].set(a)


def normalize_adjacency(a):
    """Dense version of the reference normalize_adjacency: D^-1 (A + I)."""
    n = a.shape[0]
    a = a + jnp.eye(n, dtype=a.dtype)
    degs = a @ jnp.ones((n,), a.dtype)
    return a * (1.0 / degs)[:, None]


def reference_forward(x, adj, idx, p, n_graphs, op_dtype=jnp.float32):
    """Pure-JAX reference. op_dtype=bfloat16 mimics the kernel's operand precision
    (f32 accumulation everywhere), op_dtype=float32 is the exact f32 model."""
    f32 = jnp.float32

    def mm(a, b):
        return jnp.dot(a.astype(op_dtype), b.astype(op_dtype),
                       preferred_element_type=f32)

    h = mm(x, p["w1"]) + p["b1"]
    h = jax.nn.relu(mm(adj, h))
    h = mm(h, p["w2"]) + p["b2"]
    h = jax.nn.relu(mm(adj, h))
    pooled = jax.ops.segment_sum(h.astype(op_dtype).astype(f32), idx,
                                 num_segments=n_graphs)
    pooled = (pooled - p["rmean"]) / jnp.sqrt(p["rvar"] + BN_EPS) * p["gamma"] + p["beta"]
    z = jax.nn.relu(mm(pooled, p["w3"]) + p["b3"])
    logits = mm(z, p["w4"]) + p["b4"]
    return jax.nn.log_softmax(logits, axis=1)


if __name__ == "__main__":
    N_NODES = 64      # nodes per graph-batch
    INPUT_DIM = 16
    HIDDEN_DIM = 32
    N_CLASS = 18
    N_GRAPHS = 8      # graphs per graph-batch (max(idx) + 1)
    G_BATCH = 8       # independent graph-batches per pallas_call
    GB = 4            # graph-batches fused per grid step -> grid=(2,)
    D_PAD = H_PAD = C_PAD = 128   # lane-dense feature widths

    key = jax.random.PRNGKey(0)
    k_x, k_a, k1, k2, k3, k4 = jax.random.split(key, 6)

    # node features, per batch
    x_in = jax.random.normal(k_x, (G_BATCH, N_NODES, INPUT_DIM), jnp.float32)

    # random symmetric binary adjacency per batch, then D^-1 (A + I) normalization
    raw = (jax.random.uniform(k_a, (G_BATCH, N_NODES, N_NODES)) < 0.1).astype(jnp.float32)
    raw = jnp.maximum(raw, jnp.transpose(raw, (0, 2, 1)))
    adj = jax.vmap(normalize_adjacency)(raw)

    # graph id per node (8 graphs of 8 nodes each) and its one-hot pooling matrix [B, N]
    idx = jnp.repeat(jnp.arange(N_GRAPHS, dtype=jnp.int32), N_NODES // N_GRAPHS)
    onehot = (jnp.arange(N_GRAPHS, dtype=jnp.int32)[:, None] == idx[None, :]).astype(jnp.float32)
    pool = jnp.tile(onehot[None], (G_BATCH, 1, 1))                          # [G, B, N]

    # deterministic parameters
    w1, b1 = _linear_params(k1, INPUT_DIM, HIDDEN_DIM)
    w2, b2 = _linear_params(k2, HIDDEN_DIM, HIDDEN_DIM)
    w3, b3 = _linear_params(k3, HIDDEN_DIM, HIDDEN_DIM)
    w4, b4 = _linear_params(k4, HIDDEN_DIM, N_CLASS)
    gamma = jnp.ones((HIDDEN_DIM,), jnp.float32)
    beta = jnp.zeros((HIDDEN_DIM,), jnp.float32)
    rmean = jnp.zeros((HIDDEN_DIM,), jnp.float32)
    rvar = jnp.ones((HIDDEN_DIM,), jnp.float32)

    # host-side: fold BN into fc3, pad feature dims to 128 lanes, cast matmul
    # operands (x, adj, pool, weights) to bf16; biases stay f32.
    bf16 = jnp.bfloat16
    w3f, b3f = _fold_bn_into_linear(w3, b3, gamma, beta, rmean, rvar)
    params_pad = dict(
        w1=_pad2(w1, D_PAD, H_PAD).astype(bf16), b1=_pad2(b1[None, :], 1, H_PAD),
        w2=_pad2(w2, H_PAD, H_PAD).astype(bf16), b2=_pad2(b2[None, :], 1, H_PAD),
        w3=_pad2(w3f, H_PAD, H_PAD).astype(bf16), b3=_pad2(b3f[None, :], 1, H_PAD),
        w4=_pad2(w4, H_PAD, C_PAD).astype(bf16),
        b4=_pad2(b4[None, :], 1, C_PAD, fill=NEG_FILL),
    )
    x_pad = jnp.zeros((G_BATCH, N_NODES, D_PAD), jnp.float32).at[:, :, :INPUT_DIM].set(x_in)
    x_bf = x_pad.astype(bf16)
    adj_bf = adj.astype(bf16)
    pool_bf = pool.astype(bf16)

    out = gnn_forward_batched(x_bf, adj_bf, pool_bf, params_pad, N_CLASS,
                              graphs_per_step=GB)
    out = jax.block_until_ready(out)
    out_np = np.asarray(out)

    # pure-JAX references on the unpadded problem
    ref_params = dict(w1=w1, b1=b1, w2=w2, b2=b2, w3=w3, b3=b3, w4=w4, b4=b4,
                      gamma=gamma, beta=beta, rmean=rmean, rvar=rvar)

    # (1) precision-matched reference (bf16 operands, f32 accumulation) -> tight check
    ref_bf = jax.vmap(lambda xb, ab: reference_forward(
        xb, ab, idx, ref_params, N_GRAPHS, op_dtype=jnp.bfloat16))(x_in, adj)
    np.testing.assert_allclose(out_np, np.asarray(ref_bf), atol=2e-2, rtol=2e-2)

    # (2) full-f32 reference -> loose semantic sanity check (bf16 operand rounding only)
    ref_f32 = jax.vmap(lambda xb, ab: reference_forward(
        xb, ab, idx, ref_params, N_GRAPHS, op_dtype=jnp.float32))(x_in, adj)
    np.testing.assert_allclose(out_np, np.asarray(ref_f32), atol=2e-1, rtol=2e-1)

    print("KERNEL_OK")
</pallas_src>

<mosaic_0001>
module attributes {stable_mosaic.version = 11 : i64} {
  func.func @_gnn_kernel(%arg0: i32, %arg1: memref<4x64x128xbf16, #tpu.memory_space<vmem>>, %arg2: memref<4x64x64xbf16, #tpu.memory_space<vmem>>, %arg3: memref<4x8x64xbf16, #tpu.memory_space<vmem>>, %arg4: memref<128x128xbf16, #tpu.memory_space<vmem>>, %arg5: memref<1x128xf32, #tpu.memory_space<vmem>>, %arg6: memref<128x128xbf16, #tpu.memory_space<vmem>>, %arg7: memref<1x128xf32, #tpu.memory_space<vmem>>, %arg8: memref<128x128xbf16, #tpu.memory_space<vmem>>, %arg9: memref<1x128xf32, #tpu.memory_space<vmem>>, %arg10: memref<128x128xbf16, #tpu.memory_space<vmem>>, %arg11: memref<1x128xf32, #tpu.memory_space<vmem>>, %arg12: memref<4x8x128xf32, #tpu.memory_space<vmem>>) attributes {dimension_semantics = [#tpu.dimension_semantics<parallel>], iteration_bounds = array<i64: 2>, scalar_prefetch = 0 : i64, scratch_operands = 0 : i64, tpu.core_type = #tpu.core_type<tc>, window_params = [{transform_indices = @transform_0, window_bounds = array<i64: 4, 64, 128>}, {transform_indices = @transform_1, window_bounds = array<i64: 4, 64, 64>}, {transform_indices = @transform_2, window_bounds = array<i64: 4, 8, 64>}, {pipeline_mode = #tpu.pipeline_mode<synchronous>, transform_indices = @transform_3, window_bounds = array<i64: 128, 128>}, {pipeline_mode = #tpu.pipeline_mode<synchronous>, transform_indices = @transform_4, window_bounds = array<i64: 1, 128>}, {pipeline_mode = #tpu.pipeline_mode<synchronous>, transform_indices = @transform_5, window_bounds = array<i64: 128, 128>}, {pipeline_mode = #tpu.pipeline_mode<synchronous>, transform_indices = @transform_6, window_bounds = array<i64: 1, 128>}, {pipeline_mode = #tpu.pipeline_mode<synchronous>, transform_indices = @transform_7, window_bounds = array<i64: 128, 128>}, {pipeline_mode = #tpu.pipeline_mode<synchronous>, transform_indices = @transform_8, window_bounds = array<i64: 1, 128>}, {pipeline_mode = #tpu.pipeline_mode<synchronous>, transform_indices = @transform_9, window_bounds = array<i64: 128, 128>}, {pipeline_mode = #tpu.pipeline_mode<synchronous>, transform_indices = @transform_10, window_bounds = array<i64: 1, 128>}, {transform_indices = @transform_11, window_bounds = array<i64: 4, 8, 128>}]} {
    %c0 = arith.constant 0 : index
    %c0_0 = arith.constant 0 : index
    %c0_1 = arith.constant 0 : index
    %0 = vector.load %arg2[%c0, %c0_0, %c0_1] : memref<4x64x64xbf16, #tpu.memory_space<vmem>>, vector<4x64x64xbf16>
    %c0_2 = arith.constant 0 : index
    %c0_3 = arith.constant 0 : index
    %c0_4 = arith.constant 0 : index
    %1 = vector.load %arg1[%c0_2, %c0_3, %c0_4] : memref<4x64x128xbf16, #tpu.memory_space<vmem>>, vector<4x64x128xbf16>
    %2 = vector.shape_cast %1 : vector<4x64x128xbf16> to vector<256x128xbf16>
    %c0_5 = arith.constant 0 : index
    %c0_6 = arith.constant 0 : index
    %3 = vector.load %arg4[%c0_5, %c0_6] : memref<128x128xbf16, #tpu.memory_space<vmem>>, vector<128x128xbf16>
    %cst = arith.constant dense<0.000000e+00> : vector<256x128xf32>
    %4 = tpu.matmul %2, %3, %cst {dimension_numbers = #tpu.dot_dimension_numbers<[1], [0], [0], [1], [0, 0, 1, 1], [], []>} : vector<256x128xbf16>, vector<128x128xbf16>, vector<256x128xf32> -> vector<256x128xf32>
    %c0_7 = arith.constant 0 : index
    %c0_8 = arith.constant 0 : index
    %5 = vector.load %arg5[%c0_7, %c0_8] : memref<1x128xf32, #tpu.memory_space<vmem>>, vector<1x128xf32>
    %6 = vector.broadcast %5 : vector<1x128xf32> to vector<256x128xf32>
    %7 = arith.addf %4, %6 : vector<256x128xf32>
    %8 = vector.shape_cast %7 : vector<256x128xf32> to vector<4x64x128xf32>
    %9 = arith.truncf %8 : vector<4x64x128xf32> to vector<4x64x128xbf16>
    "tpu.trace_start"() <{level = 10 : i32, message = "gij,gjh->gih"}> : () -> ()
    %cst_9 = arith.constant dense<0.000000e+00> : vector<4x64x128xf32>
    %10 = tpu.matmul %0, %9, %cst_9 {dimension_numbers = #tpu.dot_dimension_numbers<[2], [1], [1], [2], [0, 0, 0, 1, 1, 2], [0], [0]>} : vector<4x64x64xbf16>, vector<4x64x128xbf16>, vector<4x64x128xf32> -> vector<4x64x128xf32>
    "tpu.trace_stop"() : () -> ()
    %cst_10 = arith.constant 0.000000e+00 : f32
    %11 = vector.broadcast %cst_10 : f32 to vector<4x64x128xf32>
    %12 = arith.maximumf %10, %11 : vector<4x64x128xf32>
    %13 = vector.shape_cast %12 : vector<4x64x128xf32> to vector<256x128xf32>
    %14 = arith.truncf %13 : vector<256x128xf32> to vector<256x128xbf16>
    %c0_11 = arith.constant 0 : index
    %c0_12 = arith.constant 0 : index
    %15 = vector.load %arg6[%c0_11, %c0_12] : memref<128x128xbf16, #tpu.memory_space<vmem>>, vector<128x128xbf16>
    %cst_13 = arith.constant dense<0.000000e+00> : vector<256x128xf32>
    %16 = tpu.matmul %14, %15, %cst_13 {dimension_numbers = #tpu.dot_dimension_numbers<[1], [0], [0], [1], [0, 0, 1, 1], [], []>} : vector<256x128xbf16>, vector<128x128xbf16>, vector<256x128xf32> -> vector<256x128xf32>
    %c0_14 = arith.constant 0 : index
    %c0_15 = arith.constant 0 : index
    %17 = vector.load %arg7[%c0_14, %c0_15] : memref<1x128xf32, #tpu.memory_space<vmem>>, vector<1x128xf32>
    %18 = vector.broadcast %17 : vector<1x128xf32> to vector<256x128xf32>
    %19 = arith.addf %16, %18 : vector<256x128xf32>
    %20 = vector.shape_cast %19 : vector<256x128xf32> to vector<4x64x128xf32>
    %21 = arith.truncf %20 : vector<4x64x128xf32> to vector<4x64x128xbf16>
    "tpu.trace_start"() <{level = 10 : i32, message = "gij,gjh->gih"}> : () -> ()
    %cst_16 = arith.constant dense<0.000000e+00> : vector<4x64x128xf32>
    %22 = tpu.matmul %0, %21, %cst_16 {dimension_numbers = #tpu.dot_dimension_numbers<[2], [1], [1], [2], [0, 0, 0, 1, 1, 2], [0], [0]>} : vector<4x64x64xbf16>, vector<4x64x128xbf16>, vector<4x64x128xf32> -> vector<4x64x128xf32>
    "tpu.trace_stop"() : () -> ()
    %cst_17 = arith.constant 0.000000e+00 : f32
    %23 = vector.broadcast %cst_17 : f32 to vector<4x64x128xf32>
    %24 = arith.maximumf %22, %23 : vector<4x64x128xf32>
    %c0_18 = arith.constant 0 : index
    %c0_19 = arith.constant 0 : index
    %c0_20 = arith.constant 0 : index
    %25 = vector.load %arg3[%c0_18, %c0_19, %c0_20] : memref<4x8x64xbf16, #tpu.memory_space<vmem>>, vector<4x8x64xbf16>
    %26 = arith.truncf %24 : vector<4x64x128xf32> to vector<4x64x128xbf16>
    "tpu.trace_start"() <{level = 10 : i32, message = "gbn,gnh->gbh"}> : () -> ()
    %cst_21 = arith.constant dense<0.000000e+00> : vector<4x8x128xf32>
    %27 = tpu.matmul %25, %26, %cst_21 {dimension_numbers = #tpu.dot_dimension_numbers<[2], [1], [1], [2], [0, 0, 0, 1, 1, 2], [0], [0]>} : vector<4x8x64xbf16>, vector<4x64x128xbf16>, vector<4x8x128xf32> -> vector<4x8x128xf32>
    "tpu.trace_stop"() : () -> ()
    %28 = vector.shape_cast %27 : vector<4x8x128xf32> to vector<32x128xf32>
    %29 = arith.truncf %28 : vector<32x128xf32> to vector<32x128xbf16>
    %c0_22 = arith.constant 0 : index
    %c0_23 = arith.constant 0 : index
    %30 = vector.load %arg8[%c0_22, %c0_23] : memref<128x128xbf16, #tpu.memory_space<vmem>>, vector<128x128xbf16>
    %cst_24 = arith.constant dense<0.000000e+00> : vector<32x128xf32>
    %31 = tpu.matmul %29, %30, %cst_24 {dimension_numbers = #tpu.dot_dimension_numbers<[1], [0], [0], [1], [0, 0, 1, 1], [], []>} : vector<32x128xbf16>, vector<128x128xbf16>, vector<32x128xf32> -> vector<32x128xf32>
    %c0_25 = arith.constant 0 : index
    %c0_26 = arith.constant 0 : index
    %32 = vector.load %arg9[%c0_25, %c0_26] : memref<1x128xf32, #tpu.memory_space<vmem>>, vector<1x128xf32>
    %33 = vector.broadcast %32 : vector<1x128xf32> to vector<32x128xf32>
    %34 = arith.addf %31, %33 : vector<32x128xf32>
    %cst_27 = arith.constant 0.000000e+00 : f32
    %35 = vector.broadcast %cst_27 : f32 to vector<32x128xf32>
    %36 = arith.maximumf %34, %35 : vector<32x128xf32>
    %37 = arith.truncf %36 : vector<32x128xf32> to vector<32x128xbf16>
    %c0_28 = arith.constant 0 : index
    %c0_29 = arith.constant 0 : index
    %38 = vector.load %arg10[%c0_28, %c0_29] : memref<128x128xbf16, #tpu.memory_space<vmem>>, vector<128x128xbf16>
    %cst_30 = arith.constant dense<0.000000e+00> : vector<32x128xf32>
    %39 = tpu.matmul %37, %38, %cst_30 {dimension_numbers = #tpu.dot_dimension_numbers<[1], [0], [0], [1], [0, 0, 1, 1], [], []>} : vector<32x128xbf16>, vector<128x128xbf16>, vector<32x128xf32> -> vector<32x128xf32>
    %c0_31 = arith.constant 0 : index
    %c0_32 = arith.constant 0 : index
    %40 = vector.load %arg11[%c0_31, %c0_32] : memref<1x128xf32, #tpu.memory_space<vmem>>, vector<1x128xf32>
    %41 = vector.broadcast %40 : vector<1x128xf32> to vector<32x128xf32>
    %42 = arith.addf %39, %41 : vector<32x128xf32>
    %cst_33 = arith.constant dense<0xFF800000> : vector<32xf32>
    %43 = vector.multi_reduction <maximumf>, %42, %cst_33 [1] : vector<32x128xf32> to vector<32xf32>
    %44 = vector.shape_cast %43 : vector<32xf32> to vector<32x1xf32>
    %45 = vector.broadcast %44 : vector<32x1xf32> to vector<32x128xf32>
    %46 = arith.subf %42, %45 : vector<32x128xf32>
    %47 = math.exp %46 : vector<32x128xf32>
    %cst_34 = arith.constant dense<0.000000e+00> : vector<32xf32>
    %48 = vector.multi_reduction <add>, %47, %cst_34 [1] : vector<32x128xf32> to vector<32xf32>
    %49 = vector.shape_cast %48 : vector<32xf32> to vector<32x1xf32>
    %50 = math.log %49 : vector<32x1xf32>
    %51 = vector.broadcast %50 : vector<32x1xf32> to vector<32x128xf32>
    %52 = arith.subf %46, %51 : vector<32x128xf32>
    %53 = vector.shape_cast %52 : vector<32x128xf32> to vector<4x8x128xf32>
    %c0_35 = arith.constant 0 : index
    %c0_36 = arith.constant 0 : index
    %c0_37 = arith.constant 0 : index
    %54 = vector.load %arg12[%c0_35, %c0_36, %c0_37] : memref<4x8x128xf32, #tpu.memory_space<vmem>>, vector<4x8x128xf32>
    tpu.vector_store %arg12[%c0_35, %c0_36, %c0_37], %53 {strides = array<i32>} : memref<4x8x128xf32, #tpu.memory_space<vmem>>, vector<4x8x128xf32>,
    return
  }
  func.func @transform_0(%arg0: i32) -> (i32, i32, i32) {
    %c0_i32 = arith.constant 0 : i32
    %c0_i32_0 = arith.constant 0 : i32
    %c0_i32_1 = arith.constant 0 : i32
    return %arg0, %c0_i32, %c0_i32_0 : i32, i32, i32
  }
  func.func @transform_1(%arg0: i32) -> (i32, i32, i32) {
    %c0_i32 = arith.constant 0 : i32
    %c0_i32_0 = arith.constant 0 : i32
    %c0_i32_1 = arith.constant 0 : i32
    return %arg0, %c0_i32, %c0_i32_0 : i32, i32, i32
  }
  func.func @transform_2(%arg0: i32) -> (i32, i32, i32) {
    %c0_i32 = arith.constant 0 : i32
    %c0_i32_0 = arith.constant 0 : i32
    %c0_i32_1 = arith.constant 0 : i32
    return %arg0, %c0_i32, %c0_i32_0 : i32, i32, i32
  }
  func.func @transform_3(%arg0: i32) -> (i32, i32) {
    %c0_i32 = arith.constant 0 : i32
    %c0_i32_0 = arith.constant 0 : i32
    %c0_i32_1 = arith.constant 0 : i32
    return %c0_i32, %c0_i32_0 : i32, i32
  }
  func.func @transform_4(%arg0: i32) -> (i32, i32) {
    %c0_i32 = arith.constant 0 : i32
    %c0_i32_0 = arith.constant 0 : i32
    %c0_i32_1 = arith.constant 0 : i32
    return %c0_i32, %c0_i32_0 : i32, i32
  }
  func.func @transform_5(%arg0: i32) -> (i32, i32) {
    %c0_i32 = arith.constant 0 : i32
    %c0_i32_0 = arith.constant 0 : i32
    %c0_i32_1 = arith.constant 0 : i32
    return %c0_i32, %c0_i32_0 : i32, i32
  }
  func.func @transform_6(%arg0: i32) -> (i32, i32) {
    %c0_i32 = arith.constant 0 : i32
    %c0_i32_0 = arith.constant 0 : i32
    %c0_i32_1 = arith.constant 0 : i32
    return %c0_i32, %c0_i32_0 : i32, i32
  }
  func.func @transform_7(%arg0: i32) -> (i32, i32) {
    %c0_i32 = arith.constant 0 : i32
    %c0_i32_0 = arith.constant 0 : i32
    %c0_i32_1 = arith.constant 0 : i32
    return %c0_i32, %c0_i32_0 : i32, i32
  }
  func.func @transform_8(%arg0: i32) -> (i32, i32) {
    %c0_i32 = arith.constant 0 : i32
    %c0_i32_0 = arith.constant 0 : i32
    %c0_i32_1 = arith.constant 0 : i32
    return %c0_i32, %c0_i32_0 : i32, i32
  }
  func.func @transform_9(%arg0: i32) -> (i32, i32) {
    %c0_i32 = arith.constant 0 : i32
    %c0_i32_0 = arith.constant 0 : i32
    %c0_i32_1 = arith.constant 0 : i32
    return %c0_i32, %c0_i32_0 : i32, i32
  }
  func.func @transform_10(%arg0: i32) -> (i32, i32) {
    %c0_i32 = arith.constant 0 : i32
    %c0_i32_0 = arith.constant 0 : i32
    %c0_i32_1 = arith.constant 0 : i32
    return %c0_i32, %c0_i32_0 : i32, i32
  }
  func.func @transform_11(%arg0: i32) -> (i32, i32, i32) {
    %c0_i32 = arith.constant 0 : i32
    %c0_i32_0 = arith.constant 0 : i32
    %c0_i32_1 = arith.constant 0 : i32
    return %arg0, %c0_i32, %c0_i32_0 : i32, i32, i32
  }
}

</mosaic_0001>

<llo_original>
// kernel: tpu_custom_call.1
$region0: #{tpu_custom_call.1}
  #allocation0 [shape = 'u32[]', space=smem, size = 0x4, offset = 0x4, fixed_abs, tag = 'smem constant byte address 0x4 - core index']
  #allocation1 [shape = 'u32[144,128]{1,0:T(1,128)}', space=vmem, size = 0x12000, scoped, tag = 'internal scratch']
  %s0 = inlined_call_operand.hbm [shape: bf16[8,64,128], index: 0, kind: input, shape index: {}]
  %s1 = inlined_call_operand.hbm [shape: bf16[8,64,64], index: 1, kind: input, shape index: {}]
  %s2 = inlined_call_operand.hbm [shape: bf16[8,8,64], index: 2, kind: input, shape index: {}]
  %s3 = inlined_call_operand.hbm [shape: bf16[128,128], index: 3, kind: input, shape index: {}]
  %s4 = inlined_call_operand.vmem [shape: f32[1,128], index: 4, kind: input, shape index: {}]
  %s5 = inlined_call_operand.hbm [shape: bf16[128,128], index: 5, kind: input, shape index: {}]
  %s6 = inlined_call_operand.vmem [shape: f32[1,128], index: 6, kind: input, shape index: {}]
  %s7 = inlined_call_operand.hbm [shape: bf16[128,128], index: 7, kind: input, shape index: {}]
  %s8 = inlined_call_operand.vmem [shape: f32[1,128], index: 8, kind: input, shape index: {}]
  %s9 = inlined_call_operand.hbm [shape: bf16[128,128], index: 9, kind: input, shape index: {}]
  %s10 = inlined_call_operand.vmem [shape: f32[1,128], index: 10, kind: input, shape index: {}]
  %s11 = inlined_call_operand.hbm [shape: f32[8,8,128], index: 11, kind: output, shape index: {}]
  %s12 = sld [smem:[#allocation0]]
  $region105: #{tpu_custom_call.1} parent=0
    _
  %s14 = ssub.s32 1, %s12
  %s15 = scalar_select 0, %s14, %s12
  $region1: #{tpu_custom_call.1} parent=0
    #allocation2 [shape = 'u8[131072]{0}', space=vmem, size = 0x20000, scoped, tag = 'input window, operand 0']
    #allocation3 [shape = 's32[2]{0}', space=sflag, size = 0x8, scoped, tag = 'scoped memory for tpu_custom_call.1']
    #allocation4 [shape = 's32[2]{0}', space=sflag, size = 0x8, scoped, tag = 'scoped memory for tpu_custom_call.1']
    #allocation5 [shape = 'u8[131072]{0}', space=vmem, size = 0x20000, scoped, tag = 'input window, operand 1']
    #allocation6 [shape = 's32[2]{0}', space=sflag, size = 0x8, scoped, tag = 'scoped memory for tpu_custom_call.1']
    #allocation7 [shape = 'u8[16384]{0}', space=vmem, size = 0x4000, scoped, tag = 'input window, operand 2']
    #allocation8 [shape = 'u8[32768]{0}', space=vmem, size = 0x8000, scoped, tag = 'input window, operand 3, single buffered']
    #allocation9 [shape = 's32[1]{0}', space=sflag, size = 0x4, scoped, tag = 'scoped memory for tpu_custom_call.1']
    #allocation10 [shape = 'u8[32768]{0}', space=vmem, size = 0x8000, scoped, tag = 'input window, operand 5, single buffered']
    #allocation11 [shape = 'u8[32768]{0}', space=vmem, size = 0x8000, scoped, tag = 'input window, operand 7, single buffered']
    #allocation12 [shape = 's32[1]{0}', space=sflag, size = 0x4, scoped, tag = 'scoped memory for tpu_custom_call.1']
    #allocation13 [shape = 'u8[32768]{0}', space=vmem, size = 0x8000, scoped, tag = 'input window, operand 9, single buffered']
    #allocation14 [shape = 'u8[32768]{0}', space=vmem, size = 0x8000, scoped, tag = 'output window, operand 0']
    %16 = vsyncpa [#allocation3], 0
    %s17 = scalar_lea.sflag [#allocation3], 1
    %18 = vsyncpa %s17, 0
    %19 = vsyncpa [#allocation6], 0
    %s20 = scalar_lea.sflag [#allocation6], 1
    %21 = vsyncpa %s20, 0
    %22 = vsyncpa [#allocation9], 0
    %23 = vsyncpa [#allocation12], 0
    %24 = vsyncpa [#allocation4], 0
    %s25 = scalar_lea.sflag [#allocation4], 1
    %26 = vsyncpa %s25, 0
    loop: start=0, step=1, limit=4
    $region2: #{tpu_custom_call.1} parent=1 // loop_pre_header
      _
    $region3: #{tpu_custom_call.1} parent=1 // loop_header
      %s28 = sphi 0, %s32
      %p29 = scmp.ge.s32.totalorder %s28, 4
      %s38 = sphi 0, %s40
      %s41 = sphi 0, %s38
      %s42 = sphi 0, %s41
      %s58 = sphi 0, %s42
      %s64 = sphi 0, %s66
      %s67 = sphi 0, %s64
      %s68 = sphi 0, %s67
      %s84 = sphi 0, %s68
      %s90 = sphi 0, %s92
      %s93 = sphi 0, %s90
      %s94 = sphi 0, %s93
      %s110 = sphi 0, %s94
      %s114 = sphi 0, %s114
      %s116 = sphi 0, %s114
      %s117 = sphi 0, %s116
      %s131 = sphi 0, %s117
      %s135 = sphi 0, %s135
      %s137 = sphi 0, %s135
      %s138 = sphi 0, %s137
      %s152 = sphi 0, %s138
      %s156 = sphi 0, %s156
      %s158 = sphi 0, %s156
      %s159 = sphi 0, %s158
      %s173 = sphi 0, %s159
      %s177 = sphi 0, %s177
      %s179 = sphi 0, %s177
      %s180 = sphi 0, %s179
      %s194 = sphi 0, %s180
      %s198 = sphi 0, %s198
      %s200 = sphi 0, %s198
      %s201 = sphi 0, %s200
      %s215 = sphi 0, %s201
      %s219 = sphi 0, %s219
      %s221 = sphi 0, %s219
      %s222 = sphi 0, %s221
      %s236 = sphi 0, %s222
      %s240 = sphi 0, %s240
      %s242 = sphi 0, %s240
      %s243 = sphi 0, %s242
      %s257 = sphi 0, %s243
      %s261 = sphi 0, %s261
      %s263 = sphi 0, %s261
      %s264 = sphi 0, %s263
      %s278 = sphi 0, %s264
      %s284 = sphi 0, %s286
      %s287 = sphi 0, %s284
      %s288 = sphi 0, %s287
      %s304 = sphi 0, %s288
    $region4: #{tpu_custom_call.1} parent=1 // loop_header_branch
      %31 = sbr.rel (%p29) target = $region8
    $region5: #{tpu_custom_call.1} parent=1 // loop_body
      %s33 = ssub.s32 %s28, 1
      %s34 = ssub.s32 %s28, 2
      %s35 = sadd.s32 %s28, 1
      %s36 = ssub.s32 %s28, %s35
      %p37 = scmp.eq.s32.totalorder %s36, 0
      %s39 = sadd.s32 %s38, 1
      %s40 = scalar_select %p37, %s38, %s39
      %p43 = pneg %p37
      %p44 = scmp.eq.s32.totalorder %s28, 1
      %p45 = por %p43, %p44
      %p46 = scmp.ne.s32.totalorder %s38, %s41
      %p47 = scmp.eq.s32.totalorder %s28, 0
      %p48 = por %p46, %p47
      %p49 = scmp.ne.s32.totalorder %s38, %s41
      %p50 = scmp.eq.s32.totalorder %s33, 1
      %p51 = por %p49, %p50
      %p52 = scmp.ne.s32.totalorder %s41, %s42
      %p53 = scmp.eq.s32.totalorder %s33, 0
      %p54 = por %p52, %p53
      %p55 = scmp.ne.s32.totalorder %s41, %s42
      %p56 = scmp.eq.s32.totalorder %s34, 1
      %p57 = por %p55, %p56
      %p59 = scmp.ne.s32.totalorder %s42, %s58
      %p60 = scmp.eq.s32.totalorder %s34, 0
      %p61 = por %p59, %p60
      %s62 = ssub.s32 %s28, %s35
      %p63 = scmp.eq.s32.totalorder %s62, 0
      %s65 = sadd.s32 %s64, 1
      %s66 = scalar_select %p63, %s64, %s65
      %p69 = pneg %p63
      %p70 = scmp.eq.s32.totalorder %s28, 1
      %p71 = por %p69, %p70
      %p72 = scmp.ne.s32.totalorder %s64, %s67
      %p73 = scmp.eq.s32.totalorder %s28, 0
      %p74 = por %p72, %p73
      %p75 = scmp.ne.s32.totalorder %s64, %s67
      %p76 = scmp.eq.s32.totalorder %s33, 1
      %p77 = por %p75, %p76
      %p78 = scmp.ne.s32.totalorder %s67, %s68
      %p79 = scmp.eq.s32.totalorder %s33, 0
      %p80 = por %p78, %p79
      %p81 = scmp.ne.s32.totalorder %s67, %s68
      %p82 = scmp.eq.s32.totalorder %s34, 1
      %p83 = por %p81, %p82
      %p85 = scmp.ne.s32.totalorder %s68, %s84
      %p86 = scmp.eq.s32.totalorder %s34, 0
      %p87 = por %p85, %p86
      %s88 = ssub.s32 %s28, %s35
      %p89 = scmp.eq.s32.totalorder %s88, 0
      %s91 = sadd.s32 %s90, 1
      %s92 = scalar_select %p89, %s90, %s91
      %p95 = pneg %p89
      %p96 = scmp.eq.s32.totalorder %s28, 1
      %p97 = por %p95, %p96
      %p98 = scmp.ne.s32.totalorder %s90, %s93
      %p99 = scmp.eq.s32.totalorder %s28, 0
      %p100 = por %p98, %p99
      %p101 = scmp.ne.s32.totalorder %s90, %s93
      %p102 = scmp.eq.s32.totalorder %s33, 1
      %p103 = por %p101, %p102
      %p104 = scmp.ne.s32.totalorder %s93, %s94
      %p105 = scmp.eq.s32.totalorder %s33, 0
      %p106 = por %p104, %p105
      %p107 = scmp.ne.s32.totalorder %s93, %s94
      %p108 = scmp.eq.s32.totalorder %s34, 1
      %p109 = por %p107, %p108
      %p111 = scmp.ne.s32.totalorder %s94, %s110
      %p112 = scmp.eq.s32.totalorder %s34, 0
      %p113 = por %p111, %p112
      %s115 = sadd.s32 %s114, 1
      %p118 = scmp.eq.s32.totalorder %s28, 1
      %p119 = scmp.ne.s32.totalorder %s114, %s116
      %p120 = scmp.eq.s32.totalorder %s28, 0
      %p121 = por %p119, %p120
      %p122 = scmp.ne.s32.totalorder %s114, %s116
      %p123 = scmp.eq.s32.totalorder %s33, 1
      %p124 = por %p122, %p123
      %p125 = scmp.ne.s32.totalorder %s116, %s117
      %p126 = scmp.eq.s32.totalorder %s33, 0
      %p127 = por %p125, %p126
      %p128 = scmp.ne.s32.totalorder %s116, %s117
      %p129 = scmp.eq.s32.totalorder %s34, 1
      %p130 = por %p128, %p129
      %p132 = scmp.ne.s32.totalorder %s117, %s131
      %p133 = scmp.eq.s32.totalorder %s34, 0
      %p134 = por %p132, %p133
      %s136 = sadd.s32 %s135, 1
      %p139 = scmp.eq.s32.totalorder %s28, 1
      %p140 = scmp.ne.s32.totalorder %s135, %s137
      %p141 = scmp.eq.s32.totalorder %s28, 0
      %p142 = por %p140, %p141
      %p143 = scmp.ne.s32.totalorder %s135, %s137
      %p144 = scmp.eq.s32.totalorder %s33, 1
      %p145 = por %p143, %p144
      %p146 = scmp.ne.s32.totalorder %s137, %s138
      %p147 = scmp.eq.s32.totalorder %s33, 0
      %p148 = por %p146, %p147
      %p149 = scmp.ne.s32.totalorder %s137, %s138
      %p150 = scmp.eq.s32.totalorder %s34, 1
      %p151 = por %p149, %p150
      %p153 = scmp.ne.s32.totalorder %s138, %s152
      %p154 = scmp.eq.s32.totalorder %s34, 0
      %p155 = por %p153, %p154
      %s157 = sadd.s32 %s156, 1
      %p160 = scmp.eq.s32.totalorder %s28, 1
      %p161 = scmp.ne.s32.totalorder %s156, %s158
      %p162 = scmp.eq.s32.totalorder %s28, 0
      %p163 = por %p161, %p162
      %p164 = scmp.ne.s32.totalorder %s156, %s158
      %p165 = scmp.eq.s32.totalorder %s33, 1
      %p166 = por %p164, %p165
      %p167 = scmp.ne.s32.totalorder %s158, %s159
      %p168 = scmp.eq.s32.totalorder %s33, 0
      %p169 = por %p167, %p168
      %p170 = scmp.ne.s32.totalorder %s158, %s159
      %p171 = scmp.eq.s32.totalorder %s34, 1
      %p172 = por %p170, %p171
      %p174 = scmp.ne.s32.totalorder %s159, %s173
      %p175 = scmp.eq.s32.totalorder %s34, 0
      %p176 = por %p174, %p175
      %s178 = sadd.s32 %s177, 1
      %p181 = scmp.eq.s32.totalorder %s28, 1
      %p182 = scmp.ne.s32.totalorder %s177, %s179
      %p183 = scmp.eq.s32.totalorder %s28, 0
      %p184 = por %p182, %p183
      %p185 = scmp.ne.s32.totalorder %s177, %s179
      %p186 = scmp.eq.s32.totalorder %s33, 1
      %p187 = por %p185, %p186
      %p188 = scmp.ne.s32.totalorder %s179, %s180
      %p189 = scmp.eq.s32.totalorder %s33, 0
      %p190 = por %p188, %p189
      %p191 = scmp.ne.s32.totalorder %s179, %s180
      %p192 = scmp.eq.s32.totalorder %s34, 1
      %p193 = por %p191, %p192
      %p195 = scmp.ne.s32.totalorder %s180, %s194
      %p196 = scmp.eq.s32.totalorder %s34, 0
      %p197 = por %p195, %p196
      %s199 = sadd.s32 %s198, 1
      %p202 = scmp.eq.s32.totalorder %s28, 1
      %p203 = scmp.ne.s32.totalorder %s198, %s200
      %p204 = scmp.eq.s32.totalorder %s28, 0
      %p205 = por %p203, %p204
      %p206 = scmp.ne.s32.totalorder %s198, %s200
      %p207 = scmp.eq.s32.totalorder %s33, 1
      %p208 = por %p206, %p207
      %p209 = scmp.ne.s32.totalorder %s200, %s201
      %p210 = scmp.eq.s32.totalorder %s33, 0
      %p211 = por %p209, %p210
      %p212 = scmp.ne.s32.totalorder %s200, %s201
      %p213 = scmp.eq.s32.totalorder %s34, 1
      %p214 = por %p212, %p213
      %p216 = scmp.ne.s32.totalorder %s201, %s215
      %p217 = scmp.eq.s32.totalorder %s34, 0
      %p218 = por %p216, %p217
      %s220 = sadd.s32 %s219, 1
      %p223 = scmp.eq.s32.totalorder %s28, 1
      %p224 = scmp.ne.s32.totalorder %s219, %s221
      %p225 = scmp.eq.s32.totalorder %s28, 0
      %p226 = por %p224, %p225
      %p227 = scmp.ne.s32.totalorder %s219, %s221
      %p228 = scmp.eq.s32.totalorder %s33, 1
      %p229 = por %p227, %p228
      %p230 = scmp.ne.s32.totalorder %s221, %s222
      %p231 = scmp.eq.s32.totalorder %s33, 0
      %p232 = por %p230, %p231
      %p233 = scmp.ne.s32.totalorder %s221, %s222
      %p234 = scmp.eq.s32.totalorder %s34, 1
      %p235 = por %p233, %p234
      %p237 = scmp.ne.s32.totalorder %s222, %s236
      %p238 = scmp.eq.s32.totalorder %s34, 0
      %p239 = por %p237, %p238
      %s241 = sadd.s32 %s240, 1
      %p244 = scmp.eq.s32.totalorder %s28, 1
      %p245 = scmp.ne.s32.totalorder %s240, %s242
      %p246 = scmp.eq.s32.totalorder %s28, 0
      %p247 = por %p245, %p246
      %p248 = scmp.ne.s32.totalorder %s240, %s242
      %p249 = scmp.eq.s32.totalorder %s33, 1
      %p250 = por %p248, %p249
      %p251 = scmp.ne.s32.totalorder %s242, %s243
      %p252 = scmp.eq.s32.totalorder %s33, 0
      %p253 = por %p251, %p252
      %p254 = scmp.ne.s32.totalorder %s242, %s243
      %p255 = scmp.eq.s32.totalorder %s34, 1
      %p256 = por %p254, %p255
      %p258 = scmp.ne.s32.totalorder %s243, %s257
      %p259 = scmp.eq.s32.totalorder %s34, 0
      %p260 = por %p258, %p259
      %s262 = sadd.s32 %s261, 1
      %p265 = scmp.eq.s32.totalorder %s28, 1
      %p266 = scmp.ne.s32.totalorder %s261, %s263
      %p267 = scmp.eq.s32.totalorder %s28, 0
      %p268 = por %p266, %p267
      %p269 = scmp.ne.s32.totalorder %s261, %s263
      %p270 = scmp.eq.s32.totalorder %s33, 1
      %p271 = por %p269, %p270
      %p272 = scmp.ne.s32.totalorder %s263, %s264
      %p273 = scmp.eq.s32.totalorder %s33, 0
      %p274 = por %p272, %p273
      %p275 = scmp.ne.s32.totalorder %s263, %s264
      %p276 = scmp.eq.s32.totalorder %s34, 1
      %p277 = por %p275, %p276
      %p279 = scmp.ne.s32.totalorder %s264, %s278
      %p280 = scmp.eq.s32.totalorder %s34, 0
      %p281 = por %p279, %p280
      %s282 = ssub.s32 %s28, %s35
      %p283 = scmp.eq.s32.totalorder %s282, 0
      %s285 = sadd.s32 %s284, 1
      %s286 = scalar_select %p283, %s284, %s285
      %p289 = pneg %p283
      %p290 = scmp.eq.s32.totalorder %s28, 1
      %p291 = por %p289, %p290
      %p292 = scmp.ne.s32.totalorder %s284, %s287
      %p293 = scmp.eq.s32.totalorder %s28, 0
      %p294 = por %p292, %p293
      %p295 = scmp.ne.s32.totalorder %s284, %s287
      %p296 = scmp.eq.s32.totalorder %s33, 1
      %p297 = por %p295, %p296
      %p298 = scmp.ne.s32.totalorder %s287, %s288
      %p299 = scmp.eq.s32.totalorder %s33, 0
      %p300 = por %p298, %p299
      %p301 = scmp.ne.s32.totalorder %s287, %s288
      %p302 = scmp.eq.s32.totalorder %s34, 1
      %p303 = por %p301, %p302
      %p305 = scmp.ne.s32.totalorder %s288, %s304
      %p306 = scmp.eq.s32.totalorder %s34, 0
      %p307 = por %p305, %p306
      %p308 = scmp.le.s32.totalorder 1, %s28
      %p309 = scmp.lt.s32.totalorder %s28, 3
      %p310 = pnand %p308, %p309
      %p311 = pneg %p310
      // Predicated region
      $region9: #{tpu_custom_call.1} parent=5 // pred_check
        _
      $region10: #{tpu_custom_call.1} parent=5 // pred_check_branch
        %313 = sbr.rel (%p310) target = $region12
      $region11: #{tpu_custom_call.1} parent=5 // pred_region
        %s314 = ssub.s32 %s28, 1
        // Predicated region
        $region13: #{tpu_custom_call.1} parent=11 // pred_check
          %p315 = pneg %p127
        $region14: #{tpu_custom_call.1} parent=11 // pred_check_branch
          %317 = sbr.rel (%p315) target = $region16
        $region15: #{tpu_custom_call.1} parent=11 // pred_region
          %s319 = ssub.s32 1024, 1024
          %320 = vsyncadd [#allocation9], %s319
          %s321 = sshll.u32 [#allocation8], 4
          %s322 = int_to_ptr.vmem [resolvable:$true] %s321
          %327 = dma.hbm_to_vmem [thread:$0]  %s3, 1024, %s322, [#allocation9], 64, 64, 4
        $region16: #{tpu_custom_call.1} parent=11 // pred_fallthru
          _
        // Predicated region
        $region17: #{tpu_custom_call.1} parent=11 // pred_check
          %p328 = pneg %p148
        $region18: #{tpu_custom_call.1} parent=11 // pred_check_branch
          %330 = sbr.rel (%p328) target = $region20
        $region19: #{tpu_custom_call.1} parent=11 // pred_region
          _
        $region20: #{tpu_custom_call.1} parent=11 // pred_fallthru
          _
        // Predicated region
        $region21: #{tpu_custom_call.1} parent=11 // pred_check
          %p331 = pneg %p169
        $region22: #{tpu_custom_call.1} parent=11 // pred_check_branch
          %333 = sbr.rel (%p331) target = $region24
        $region23: #{tpu_custom_call.1} parent=11 // pred_region
          %s335 = ssub.s32 1024, 1024
          %336 = vsyncadd [#allocation9], %s335
          %s337 = sshll.u32 [#allocation10], 4
          %s338 = int_to_ptr.vmem [resolvable:$true] %s337
          %343 = dma.hbm_to_vmem [thread:$0]  %s5, 1024, %s338, [#allocation9], 64, 64, 4
        $region24: #{tpu_custom_call.1} parent=11 // pred_fallthru
          _
        // Predicated region
        $region25: #{tpu_custom_call.1} parent=11 // pred_check
          %p344 = pneg %p190
        $region26: #{tpu_custom_call.1} parent=11 // pred_check_branch
          %346 = sbr.rel (%p344) target = $region28
        $region27: #{tpu_custom_call.1} parent=11 // pred_region
          _
        $region28: #{tpu_custom_call.1} parent=11 // pred_fallthru
          _
        // Predicated region
        $region29: #{tpu_custom_call.1} parent=11 // pred_check
          %p347 = pneg %p211
        $region30: #{tpu_custom_call.1} parent=11 // pred_check_branch
          %349 = sbr.rel (%p347) target = $region32
        $region31: #{tpu_custom_call.1} parent=11 // pred_region
          %s351 = ssub.s32 1024, 1024
          %352 = vsyncadd [#allocation12], %s351
          %s353 = sshll.u32 [#allocation11], 4
          %s354 = int_to_ptr.vmem [resolvable:$true] %s353
          %359 = dma.hbm_to_vmem [thread:$0]  %s7, 1024, %s354, [#allocation12], 64, 64, 4
        $region32: #{tpu_custom_call.1} parent=11 // pred_fallthru
          _
        // Predicated region
        $region33: #{tpu_custom_call.1} parent=11 // pred_check
          %p360 = pneg %p232
        $region34: #{tpu_custom_call.1} parent=11 // pred_check_branch
          %362 = sbr.rel (%p360) target = $region36
        $region35: #{tpu_custom_call.1} parent=11 // pred_region
          _
        $region36: #{tpu_custom_call.1} parent=11 // pred_fallthru
          _
        // Predicated region
        $region37: #{tpu_custom_call.1} parent=11 // pred_check
          %p363 = pneg %p253
        $region38: #{tpu_custom_call.1} parent=11 // pred_check_branch
          %365 = sbr.rel (%p363) target = $region40
        $region39: #{tpu_custom_call.1} parent=11 // pred_region
          %s367 = ssub.s32 1024, 1024
          %368 = vsyncadd [#allocation12], %s367
          %s369 = sshll.u32 [#allocation13], 4
          %s370 = int_to_ptr.vmem [resolvable:$true] %s369
          %375 = dma.hbm_to_vmem [thread:$0]  %s9, 1024, %s370, [#allocation12], 64, 64, 4
        $region40: #{tpu_custom_call.1} parent=11 // pred_fallthru
          _
        // Predicated region
        $region41: #{tpu_custom_call.1} parent=11 // pred_check
          %p376 = pneg %p274
        $region42: #{tpu_custom_call.1} parent=11 // pred_check_branch
          %378 = sbr.rel (%p376) target = $region44
        $region43: #{tpu_custom_call.1} parent=11 // pred_region
          _
        $region44: #{tpu_custom_call.1} parent=11 // pred_fallthru
          _
      $region12: #{tpu_custom_call.1} parent=5 // pred_fallthru
        _
      %p379 = scmp.lt.s32.totalorder %s28, 2
      // Predicated region
      $region45: #{tpu_custom_call.1} parent=5 // pred_check
        %p380 = pneg %p379
      $region46: #{tpu_custom_call.1} parent=5 // pred_check_branch
        %382 = sbr.rel (%p380) target = $region48
      $region47: #{tpu_custom_call.1} parent=5 // pred_region
        // Predicated region
        $region49: #{tpu_custom_call.1} parent=47 // pred_check
          %p383 = pneg %p48
        $region50: #{tpu_custom_call.1} parent=47 // pred_check_branch
          %385 = sbr.rel (%p383) target = $region52
        $region51: #{tpu_custom_call.1} parent=47 // pred_region
          %s386 = sand.u32 %s38, 1
          %s387 = scalar_lea.sflag [#allocation3], %s386
          %s388 = sand.u32 %s38, 1
          %s389 = smul.addr %s388, 128
          %s390 = scalar_lea.vmem [#allocation2], %s389
          %s391 = smul.u32 4, %s28
          %s393 = ssub.s32 2048, 2048
          %394 = vsyncadd %s387, %s393
          %s395 = smul.addr %s391, 8
          %s396 = smul.addr %s395, 64
          %s397 = scalar_lea.hbm %s0, %s396
          %s398 = sshll.u32 %s390, 4
          %s399 = int_to_ptr.vmem [resolvable:$true] %s398
          %404 = dma.hbm_to_vmem [thread:$0]  %s397, 2048, %s399, %s387, 64, 64, 4
        $region52: #{tpu_custom_call.1} parent=47 // pred_fallthru
          _
        // Predicated region
        $region53: #{tpu_custom_call.1} parent=47 // pred_check
          %p405 = pneg %p74
        $region54: #{tpu_custom_call.1} parent=47 // pred_check_branch
          %407 = sbr.rel (%p405) target = $region56
        $region55: #{tpu_custom_call.1} parent=47 // pred_region
          %s408 = sand.u32 %s28, 1
          %s409 = scalar_lea.sflag [#allocation6], %s408
          %s410 = sand.u32 %s64, 1
          %s411 = smul.addr %s410, 128
          %s412 = scalar_lea.vmem [#allocation5], %s411
          %s413 = smul.u32 4, %s28
          %s415 = ssub.s32 2048, 2048
          %416 = vsyncadd %s409, %s415
          %s417 = smul.addr %s413, 8
          %s418 = smul.addr %s417, 64
          %s419 = scalar_lea.hbm %s1, %s418
          %s420 = sshll.u32 %s412, 4
          %s421 = int_to_ptr.vmem [resolvable:$true] %s420
          %426 = dma.hbm_to_vmem [thread:$0]  %s419, 2048, %s421, %s409, 64, 64, 4
        $region56: #{tpu_custom_call.1} parent=47 // pred_fallthru
          _
        // Predicated region
        $region57: #{tpu_custom_call.1} parent=47 // pred_check
          %p427 = pneg %p100
        $region58: #{tpu_custom_call.1} parent=47 // pred_check_branch
          %429 = sbr.rel (%p427) target = $region60
        $region59: #{tpu_custom_call.1} parent=47 // pred_region
          %s430 = sand.u32 %s28, 1
          %s431 = scalar_lea.sflag [#allocation6], %s430
          %s432 = sand.u32 %s90, 1
          %s433 = smul.addr %s432, 16
          %s434 = scalar_lea.vmem [#allocation7], %s433
          %s435 = smul.u32 4, %s28
          %s437 = ssub.s32 256, 256
          %438 = vsyncadd %s431, %s437
          %s439 = smul.addr %s435, 64
          %s440 = scalar_lea.hbm %s2, %s439
          %s441 = sshll.u32 %s434, 4
          %s442 = int_to_ptr.vmem [resolvable:$true] %s441
          %447 = dma.hbm_to_vmem [thread:$0]  %s440, 256, %s442, %s431, 64, 64, 4
        $region60: #{tpu_custom_call.1} parent=47 // pred_fallthru
          _
      $region48: #{tpu_custom_call.1} parent=5 // pred_fallthru
        _
      %p448 = scmp.le.s32.totalorder 1, %s28
      %p449 = scmp.lt.s32.totalorder %s28, 3
      %p450 = pnand %p448, %p449
      %p451 = pneg %p450
      // Predicated region
      $region61: #{tpu_custom_call.1} parent=5 // pred_check
        _
      $region62: #{tpu_custom_call.1} parent=5 // pred_check_branch
        %453 = sbr.rel (%p450) target = $region64
      $region63: #{tpu_custom_call.1} parent=5 // pred_region
        %s454 = ssub.s32 %s28, 1
        %s455 = sand.u32 %s41, 1
        %s456 = scalar_lea.sflag [#allocation3], %s455
        %s457 = sand.u32 %s41, 1
        %s458 = smul.addr %s457, 128
        %s459 = scalar_lea.vmem [#allocation2], %s458
        // Predicated region
        $region65: #{tpu_custom_call.1} parent=63 // pred_check
          %p460 = pneg %p54
        $region66: #{tpu_custom_call.1} parent=63 // pred_check_branch
          %462 = sbr.rel (%p460) target = $region68
        $region67: #{tpu_custom_call.1} parent=63 // pred_region
          %463 = dma.done %s456, 2048
        $region68: #{tpu_custom_call.1} parent=63 // pred_fallthru
          _
        %s464 = sand.u32 %s33, 1
        %s465 = scalar_lea.sflag [#allocation6], %s464
        %s466 = sand.u32 %s67, 1
        %s467 = smul.addr %s466, 128
        %s468 = scalar_lea.vmem [#allocation5], %s467
        // Predicated region
        $region69: #{tpu_custom_call.1} parent=63 // pred_check
          %p469 = pneg %p80
        $region70: #{tpu_custom_call.1} parent=63 // pred_check_branch
          %471 = sbr.rel (%p469) target = $region72
        $region71: #{tpu_custom_call.1} parent=63 // pred_region
          %472 = dma.done %s465, 2048
        $region72: #{tpu_custom_call.1} parent=63 // pred_fallthru
          _
        %s473 = sand.u32 %s33, 1
        %s474 = scalar_lea.sflag [#allocation6], %s473
        %s475 = sand.u32 %s93, 1
        %s476 = smul.addr %s475, 16
        %s477 = scalar_lea.vmem [#allocation7], %s476
        // Predicated region
        $region73: #{tpu_custom_call.1} parent=63 // pred_check
          %p478 = pneg %p106
        $region74: #{tpu_custom_call.1} parent=63 // pred_check_branch
          %480 = sbr.rel (%p478) target = $region76
        $region75: #{tpu_custom_call.1} parent=63 // pred_region
          %481 = dma.done %s474, 256
        $region76: #{tpu_custom_call.1} parent=63 // pred_fallthru
          _
        // Predicated region
        $region77: #{tpu_custom_call.1} parent=63 // pred_check
          %p482 = pneg %p127
        $region78: #{tpu_custom_call.1} parent=63 // pred_check_branch
          %484 = sbr.rel (%p482) target = $region80
        $region79: #{tpu_custom_call.1} parent=63 // pred_region
          %485 = dma.done [#allocation9], 1024
        $region80: #{tpu_custom_call.1} parent=63 // pred_fallthru
          _
        // Predicated region
        $region81: #{tpu_custom_call.1} parent=63 // pred_check
          %p486 = pneg %p169
        $region82: #{tpu_custom_call.1} parent=63 // pred_check_branch
          %488 = sbr.rel (%p486) target = $region84
        $region83: #{tpu_custom_call.1} parent=63 // pred_region
          %489 = dma.done [#allocation9], 1024
        $region84: #{tpu_custom_call.1} parent=63 // pred_fallthru
          _
        // Predicated region
        $region85: #{tpu_custom_call.1} parent=63 // pred_check
          %p490 = pneg %p211
        $region86: #{tpu_custom_call.1} parent=63 // pred_check_branch
          %492 = sbr.rel (%p490) target = $region88
        $region87: #{tpu_custom_call.1} parent=63 // pred_region
          %493 = dma.done [#allocation12], 1024
        $region88: #{tpu_custom_call.1} parent=63 // pred_fallthru
          _
        // Predicated region
        $region89: #{tpu_custom_call.1} parent=63 // pred_check
          %p494 = pneg %p253
        $region90: #{tpu_custom_call.1} parent=63 // pred_check_branch
          %496 = sbr.rel (%p494) target = $region92
        $region91: #{tpu_custom_call.1} parent=63 // pred_region
          %497 = dma.done [#allocation12], 1024
        $region92: #{tpu_custom_call.1} parent=63 // pred_fallthru
          _
        %s498 = sand.u32 %s41, 1
        %s499 = scalar_lea.sflag [#allocation3], %s498
        %s500 = sand.u32 %s41, 1
        %s501 = smul.addr %s500, 128
        %s502 = scalar_lea.vmem [#allocation2], %s501
        %p503 = pneg %p54
        %p504 = pneg %p51
        %s505 = sand.u32 %s33, 1
        %s506 = scalar_lea.sflag [#allocation6], %s505
        %s507 = sand.u32 %s67, 1
        %s508 = smul.addr %s507, 128
        %s509 = scalar_lea.vmem [#allocation5], %s508
        %p510 = pneg %p80
        %p511 = pneg %p77
        %s512 = sand.u32 %s33, 1
        %s513 = scalar_lea.sflag [#allocation6], %s512
        %s514 = sand.u32 %s93, 1
        %s515 = smul.addr %s514, 16
        %s516 = scalar_lea.vmem [#allocation7], %s515
        %p517 = pneg %p106
        %p518 = pneg %p103
        %p519 = pneg %p127
        %p520 = pneg %p124
        %p521 = pneg %p148
        %p522 = pneg %p145
        %p523 = pneg %p169
        %p524 = pneg %p166
        %p525 = pneg %p190
        %p526 = pneg %p187
        %p527 = pneg %p211
        %p528 = pneg %p208
        %p529 = pneg %p232
        %p530 = pneg %p229
        %p531 = pneg %p253
        %p532 = pneg %p250
        %p533 = pneg %p274
        %p534 = pneg %p271
        %p535 = pneg %p300
        %p536 = pneg %p297
        %s537 = sand.u32 %s287, 1
        %s538 = scalar_lea.sflag [#allocation4], %s537
        %s539 = sand.u32 %s287, 1
        %s540 = smul.addr %s539, 32
        %s541 = scalar_lea.vmem [#allocation14], %s540
        %s542 = smul.u32 4, %s33
        %s543 = smul.u32 4, %s33
        %s544 = smul.u32 4, %s33
        %s545 = smul.u32 4, %s33
        %v547 = vld [vmem:[%s468] sm:$0xf]
        %v548 = vld [vmem:[%s468 + $0x4] sm:$0xf]
        %v549 = vld [vmem:[%s468 + $0x8] sm:$0xf]
        %v550 = vld [vmem:[%s468 + $0xc] sm:$0xf]
        %v551 = vld [vmem:[%s468 + $0x10] sm:$0xf]
        %v552 = vld [vmem:[%s468 + $0x14] sm:$0xf]
        %v553 = vld [vmem:[%s468 + $0x18] sm:$0xf]
        %v554 = vld [vmem:[%s468 + $0x1c] sm:$0xf]
        %v555 = vld [vmem:[%s468 + $0x20] sm:$0xf]
        %v556 = vld [vmem:[%s468 + $0x24] sm:$0xf]
        %v557 = vld [vmem:[%s468 + $0x28] sm:$0xf]
        %v558 = vld [vmem:[%s468 + $0x2c] sm:$0xf]
        %v559 = vld [vmem:[%s468 + $0x30] sm:$0xf]
        %v560 = vld [vmem:[%s468 + $0x34] sm:$0xf]
        %v561 = vld [vmem:[%s468 + $0x38] sm:$0xf]
        %v562 = vld [vmem:[%s468 + $0x3c] sm:$0xf]
        %v563 = vld [vmem:[%s468 + $0x40] sm:$0xf]
        %v564 = vld [vmem:[%s468 + $0x44] sm:$0xf]
        %v565 = vld [vmem:[%s468 + $0x48] sm:$0xf]
        %v566 = vld [vmem:[%s468 + $0x4c] sm:$0xf]
        %v567 = vld [vmem:[%s468 + $0x50] sm:$0xf]
        %v568 = vld [vmem:[%s468 + $0x54] sm:$0xf]
        %v569 = vld [vmem:[%s468 + $0x58] sm:$0xf]
        %v570 = vld [vmem:[%s468 + $0x5c] sm:$0xf]
        %v571 = vld [vmem:[%s468 + $0x60] sm:$0xf]
        %v572 = vld [vmem:[%s468 + $0x64] sm:$0xf]
        %v573 = vld [vmem:[%s468 + $0x68] sm:$0xf]
        %v574 = vld [vmem:[%s468 + $0x6c] sm:$0xf]
        %v575 = vld [vmem:[%s468 + $0x70] sm:$0xf]
        %v576 = vld [vmem:[%s468 + $0x74] sm:$0xf]
        %v577 = vld [vmem:[%s468 + $0x78] sm:$0xf]
        %v578 = vld [vmem:[%s468 + $0x7c] sm:$0xf]
        %v579 = vld [vmem:[%s459] sm:$0xf]
        %v580 = vld [vmem:[%s459 + $0x4] sm:$0xf]
        %v581 = vld [vmem:[%s459 + $0x8] sm:$0xf]
        %v582 = vld [vmem:[%s459 + $0xc] sm:$0xf]
        %v583 = vld [vmem:[%s459 + $0x10] sm:$0xf]
        %v584 = vld [vmem:[%s459 + $0x14] sm:$0xf]
        %v585 = vld [vmem:[%s459 + $0x18] sm:$0xf]
        %v586 = vld [vmem:[%s459 + $0x1c] sm:$0xf]
        %v587 = vld [vmem:[%s459 + $0x20] sm:$0xf]
        %v588 = vld [vmem:[%s459 + $0x24] sm:$0xf]
        %v589 = vld [vmem:[%s459 + $0x28] sm:$0xf]
        %v590 = vld [vmem:[%s459 + $0x2c] sm:$0xf]
        %v591 = vld [vmem:[%s459 + $0x30] sm:$0xf]
        %v592 = vld [vmem:[%s459 + $0x34] sm:$0xf]
        %v593 = vld [vmem:[%s459 + $0x38] sm:$0xf]
        %v594 = vld [vmem:[%s459 + $0x3c] sm:$0xf]
        %v595 = vld [vmem:[%s459 + $0x40] sm:$0xf]
        %v596 = vld [vmem:[%s459 + $0x44] sm:$0xf]
        %v597 = vld [vmem:[%s459 + $0x48] sm:$0xf]
        %v598 = vld [vmem:[%s459 + $0x4c] sm:$0xf]
        %v599 = vld [vmem:[%s459 + $0x50] sm:$0xf]
        %v600 = vld [vmem:[%s459 + $0x54] sm:$0xf]
        %v601 = vld [vmem:[%s459 + $0x58] sm:$0xf]
        %v602 = vld [vmem:[%s459 + $0x5c] sm:$0xf]
        %v603 = vld [vmem:[%s459 + $0x60] sm:$0xf]
        %v604 = vld [vmem:[%s459 + $0x64] sm:$0xf]
        %v605 = vld [vmem:[%s459 + $0x68] sm:$0xf]
        %v606 = vld [vmem:[%s459 + $0x6c] sm:$0xf]
        %v607 = vld [vmem:[%s459 + $0x70] sm:$0xf]
        %v608 = vld [vmem:[%s459 + $0x74] sm:$0xf]
        %v609 = vld [vmem:[%s459 + $0x78] sm:$0xf]
        %v610 = vld [vmem:[%s459 + $0x7c] sm:$0xf]
        %v611 = vld [vmem:[#allocation8] sm:$0xf]
        %v612 = vld [vmem:[#allocation8 + $0x4] sm:$0xf]
        %v613 = vld [vmem:[#allocation8 + $0x8] sm:$0xf]
        %v614 = vld [vmem:[#allocation8 + $0xc] sm:$0xf]
        %v615 = vld [vmem:[#allocation8 + $0x10] sm:$0xf]
        %v616 = vld [vmem:[#allocation8 + $0x14] sm:$0xf]
        %v617 = vld [vmem:[#allocation8 + $0x18] sm:$0xf]
        %v618 = vld [vmem:[#allocation8 + $0x1c] sm:$0xf]
        %v619 = vld [vmem:[#allocation8 + $0x20] sm:$0xf]
        %v620 = vld [vmem:[#allocation8 + $0x24] sm:$0xf]
        %v621 = vld [vmem:[#allocation8 + $0x28] sm:$0xf]
        %v622 = vld [vmem:[#allocation8 + $0x2c] sm:$0xf]
        %v623 = vld [vmem:[#allocation8 + $0x30] sm:$0xf]
        %v624 = vld [vmem:[#allocation8 + $0x34] sm:$0xf]
        %v625 = vld [vmem:[#allocation8 + $0x38] sm:$0xf]
        %v626 = vld [vmem:[#allocation8 + $0x3c] sm:$0xf]
        %v627 = vld [vmem:[%s4] sm:$0x1]
        %v629 = vlaneseq
        %v630 = vshrl.u32 %v629, 7
        %v631 = vsub.s32 0, %v630
        %v632 = vrot.slane %v627, %v631
        %v666 = vunpack.c.l.b16 %v579
        %v667 = vunpack.c.l.b16 %v580
        %v668 = vunpack.c.l.b16 %v581
        %v669 = vunpack.c.l.b16 %v582
        %v670 = vunpack.c.l.b16 %v583
        %v671 = vunpack.c.l.b16 %v584
        %v672 = vunpack.c.l.b16 %v585
        %v673 = vunpack.c.l.b16 %v586
        %v674 = vunpack.c.l.b16 %v587
        %v675 = vunpack.c.l.b16 %v588
        %v676 = vunpack.c.l.b16 %v589
        %v677 = vunpack.c.l.b16 %v590
        %v678 = vunpack.c.l.b16 %v591
        %v679 = vunpack.c.l.b16 %v592
        %v680 = vunpack.c.l.b16 %v593
        %v681 = vunpack.c.l.b16 %v594
        %v682 = vunpack.c.l.b16 %v595
        %v683 = vunpack.c.l.b16 %v596
        %v684 = vunpack.c.l.b16 %v597
        %v685 = vunpack.c.l.b16 %v598
        %v686 = vunpack.c.l.b16 %v599
        %v687 = vunpack.c.l.b16 %v600
        %v688 = vunpack.c.l.b16 %v601
        %v689 = vunpack.c.l.b16 %v602
        %v690 = vunpack.c.l.b16 %v603
        %v691 = vunpack.c.l.b16 %v604
        %v692 = vunpack.c.l.b16 %v605
        %v693 = vunpack.c.l.b16 %v606
        %v694 = vunpack.c.l.b16 %v607
        %v695 = vunpack.c.l.b16 %v608
        %v696 = vunpack.c.l.b16 %v609
        %v697 = vunpack.c.l.b16 %v610
        %v698 = vpack.c.b16 %v667, %v666
        %v699 = vpack.c.b16 %v669, %v668
        %v700 = vpack.c.b16 %v671, %v670
        %v701 = vpack.c.b16 %v673, %v672
        %v702 = vpack.c.b16 %v675, %v674
        %v703 = vpack.c.b16 %v677, %v676
        %v704 = vpack.c.b16 %v679, %v678
        %v705 = vpack.c.b16 %v681, %v680
        %v706 = vpack.c.b16 %v683, %v682
        %v707 = vpack.c.b16 %v685, %v684
        %v708 = vpack.c.b16 %v687, %v686
        %v709 = vpack.c.b16 %v689, %v688
        %v710 = vpack.c.b16 %v691, %v690
        %v711 = vpack.c.b16 %v693, %v692
        %v712 = vpack.c.b16 %v695, %v694
        %v713 = vpack.c.b16 %v697, %v696
        %v746 = vunpack.c.l.b16 %v611
        %v747 = vunpack.c.l.b16 %v612
        %v748 = vunpack.c.l.b16 %v613
        %v749 = vunpack.c.l.b16 %v614
        %v750 = vunpack.c.l.b16 %v615
        %v751 = vunpack.c.l.b16 %v616
        %v752 = vunpack.c.l.b16 %v617
        %v753 = vunpack.c.l.b16 %v618
        %v754 = vunpack.c.l.b16 %v619
        %v755 = vunpack.c.l.b16 %v620
        %v756 = vunpack.c.l.b16 %v621
        %v757 = vunpack.c.l.b16 %v622
        %v758 = vunpack.c.l.b16 %v623
        %v759 = vunpack.c.l.b16 %v624
        %v760 = vunpack.c.l.b16 %v625
        %v761 = vunpack.c.l.b16 %v626
        %v762 = vpack.c.b16 %v747, %v746
        %v763 = vpack.c.b16 %v749, %v748
        %v764 = vpack.c.b16 %v751, %v750
        %v765 = vpack.c.b16 %v753, %v752
        %v766 = vpack.c.b16 %v755, %v754
        %v767 = vpack.c.b16 %v757, %v756
        %v768 = vpack.c.b16 %v759, %v758
        %v769 = vpack.c.b16 %v761, %v760
        %778 = vmatprep.subr.bf16.mxu0 0
        %779 = vmatpush1.bf16.msra.mxu0 %v762
        %780 = vmatprep.subr.bf16.mxu0 0
        %781 = vmatpush1.bf16.msra.mxu0 %v763
        %782 = vmatprep.subr.bf16.mxu0 0
        %783 = vmatpush1.bf16.msra.mxu0 %v764
        %784 = vmatprep.subr.bf16.mxu0 0
        %785 = vmatpush1.bf16.msra.mxu0 %v765
        %786 = vmatprep.subr.bf16.mxu0 0
        %787 = vmatpush1.bf16.msra.mxu0 %v766
        %788 = vmatprep.subr.bf16.mxu0 0
        %789 = vmatpush1.bf16.msra.mxu0 %v767
        %790 = vmatprep.subr.bf16.mxu0 0
        %791 = vmatpush1.bf16.msra.mxu0 %v768
        %792 = vmatprep.subr.bf16.mxu0 0
        %793 = vmatpush1.bf16.msra.mxu0 %v769
        %794 = vmatprep.subr.bf16.mxu0 0
        %795 = vmatpush1.bf16.msra.mxu0 0
        %796 = vmatprep.subr.bf16.mxu0 0
        %797 = vmatpush1.bf16.msra.mxu0 0
        %798 = vmatprep.subr.bf16.mxu0 0
        %799 = vmatpush1.bf16.msra.mxu0 0
        %800 = vmatprep.subr.bf16.mxu0 0
        %801 = vmatpush1.bf16.msra.mxu0 0
        %802 = vmatprep.subr.bf16.mxu0 0
        %803 = vmatpush1.bf16.msra.mxu0 0
        %804 = vmatprep.subr.bf16.mxu0 0
        %805 = vmatpush1.bf16.msra.mxu0 0
        %806 = vmatprep.subr.bf16.mxu0 0
        %807 = vmatpush1.bf16.msra.mxu0 0
        %808 = vmatprep.subr.bf16.mxu0 0
        %809 = vmatpush1.bf16.msra.mxu0 0
        %810 = vmatprep.mubr.bf16.mxu0 0
        %811 = vmatmul.mubr.bf16.gmra.mrb[0].mxu0 %v698
        %v812 = vpop.f32.mrb[0].mxu0
        %v813 = vadd.f32 %v632, %v812
        %v814 = vpop.f32.mrb[0].mxu0
        %v815 = vpop.f32.mrb[0].mxu0
        %v816 = vadd.f32 %v632, %v815
        %v817 = vpop.f32.mrb[0].mxu0
        %818 = vmatprep.mubr.bf16.mxu0 0
        %819 = vmatmul.mubr.bf16.gmra.mrb[0].mxu0 %v699
        %v820 = vpop.f32.mrb[0].mxu0
        %v821 = vadd.f32 %v632, %v820
        %v822 = vpop.f32.mrb[0].mxu0
        %v823 = vpop.f32.mrb[0].mxu0
        %v824 = vadd.f32 %v632, %v823
        %v825 = vpop.f32.mrb[0].mxu0
        %826 = vmatprep.mubr.bf16.mxu0 0
        %827 = vmatmul.mubr.bf16.gmra.mrb[0].mxu0 %v700
        %v828 = vpop.f32.mrb[0].mxu0
        %v829 = vadd.f32 %v632, %v828
        %v830 = vpop.f32.mrb[0].mxu0
        %v831 = vpop.f32.mrb[0].mxu0
        %v832 = vadd.f32 %v632, %v831
        %v833 = vpop.f32.mrb[0].mxu0
        %834 = vmatprep.mubr.bf16.mxu0 0
        %835 = vmatmul.mubr.bf16.gmra.mrb[0].mxu0 %v701
        %v836 = vpop.f32.mrb[0].mxu0
        %v837 = vadd.f32 %v632, %v836
        %v838 = vpop.f32.mrb[0].mxu0
        %v839 = vpop.f32.mrb[0].mxu0
        %v840 = vadd.f32 %v632, %v839
        %v841 = vpop.f32.mrb[0].mxu0
        %842 = vmatprep.mubr.bf16.mxu0 0
        %843 = vmatmul.mubr.bf16.gmra.mrb[0].mxu0 %v702
        %v844 = vpop.f32.mrb[0].mxu0
        %v845 = vadd.f32 %v632, %v844
        %v846 = vpop.f32.mrb[0].mxu0
        %v847 = vpop.f32.mrb[0].mxu0
        %v848 = vadd.f32 %v632, %v847
        %v849 = vpop.f32.mrb[0].mxu0
        %850 = vmatprep.mubr.bf16.mxu0 0
        %851 = vmatmul.mubr.bf16.gmra.mrb[0].mxu0 %v703
        %v852 = vpop.f32.mrb[0].mxu0
        %v853 = vadd.f32 %v632, %v852
        %v854 = vpop.f32.mrb[0].mxu0
        %v855 = vpop.f32.mrb[0].mxu0
        %v856 = vadd.f32 %v632, %v855
        %v857 = vpop.f32.mrb[0].mxu0
        %858 = vmatprep.mubr.bf16.mxu0 0
        %859 = vmatmul.mubr.bf16.gmra.mrb[0].mxu0 %v704
        %v860 = vpop.f32.mrb[0].mxu0
        %v861 = vadd.f32 %v632, %v860
        %v862 = vpop.f32.mrb[0].mxu0
        %v863 = vpop.f32.mrb[0].mxu0
        %v864 = vadd.f32 %v632, %v863
        %v865 = vpop.f32.mrb[0].mxu0
        %866 = vmatprep.mubr.bf16.mxu0 0
        %867 = vmatmul.mubr.bf16.gmra.mrb[0].mxu0 %v705
        %v868 = vpop.f32.mrb[0].mxu0
        %v869 = vadd.f32 %v632, %v868
        %v870 = vpop.f32.mrb[0].mxu0
        %v871 = vpop.f32.mrb[0].mxu0
        %v872 = vadd.f32 %v632, %v871
        %v873 = vpop.f32.mrb[0].mxu0
        %874 = vmatprep.mubr.bf16.mxu0 0
        %875 = vmatmul.mubr.bf16.gmra.mrb[0].mxu0 %v706
        %v876 = vpop.f32.mrb[0].mxu0
        %v877 = vadd.f32 %v632, %v876
        %v878 = vpop.f32.mrb[0].mxu0
        %v879 = vpop.f32.mrb[0].mxu0
        %v880 = vadd.f32 %v632, %v879
        %v881 = vpop.f32.mrb[0].mxu0
        %882 = vmatprep.mubr.bf16.mxu0 0
        %883 = vmatmul.mubr.bf16.gmra.mrb[0].mxu0 %v707
        %v884 = vpop.f32.mrb[0].mxu0
        %v885 = vadd.f32 %v632, %v884
        %v886 = vpop.f32.mrb[0].mxu0
        %v887 = vpop.f32.mrb[0].mxu0
        %v888 = vadd.f32 %v632, %v887
        %v889 = vpop.f32.mrb[0].mxu0
        %890 = vmatprep.mubr.bf16.mxu0 0
        %891 = vmatmul.mubr.bf16.gmra.mrb[0].mxu0 %v708
        %v892 = vpop.f32.mrb[0].mxu0
        %v893 = vadd.f32 %v632, %v892
        %v894 = vpop.f32.mrb[0].mxu0
        %v895 = vpop.f32.mrb[0].mxu0
        %v896 = vadd.f32 %v632, %v895
        %v897 = vpop.f32.mrb[0].mxu0
        %898 = vmatprep.mubr.bf16.mxu0 0
        %899 = vmatmul.mubr.bf16.gmra.mrb[0].mxu0 %v709
        %v900 = vpop.f32.mrb[0].mxu0
        %v901 = vadd.f32 %v632, %v900
        %v902 = vpop.f32.mrb[0].mxu0
        %v903 = vpop.f32.mrb[0].mxu0
        %v904 = vadd.f32 %v632, %v903
        %v905 = vpop.f32.mrb[0].mxu0
        %906 = vmatprep.mubr.bf16.mxu0 0
        %907 = vmatmul.mubr.bf16.gmra.mrb[0].mxu0 %v710
        %v908 = vpop.f32.mrb[0].mxu0
        %v909 = vadd.f32 %v632, %v908
        %v910 = vpop.f32.mrb[0].mxu0
        %v911 = vpop.f32.mrb[0].mxu0
        %v912 = vadd.f32 %v632, %v911
        %v913 = vpop.f32.mrb[0].mxu0
        %914 = vmatprep.mubr.bf16.mxu0 0
        %915 = vmatmul.mubr.bf16.gmra.mrb[0].mxu0 %v711
        %v916 = vpop.f32.mrb[0].mxu0
        %v917 = vadd.f32 %v632, %v916
        %v918 = vpop.f32.mrb[0].mxu0
        %v919 = vpop.f32.mrb[0].mxu0
        %v920 = vadd.f32 %v632, %v919
        %v921 = vpop.f32.mrb[0].mxu0
        %922 = vmatprep.mubr.bf16.mxu0 0
        %923 = vmatmul.mubr.bf16.gmra.mrb[0].mxu0 %v712
        %v924 = vpop.f32.mrb[0].mxu0
        %v925 = vadd.f32 %v632, %v924
        %v926 = vpop.f32.mrb[0].mxu0
        %v927 = vpop.f32.mrb[0].mxu0
        %v928 = vadd.f32 %v632, %v927
        %v929 = vpop.f32.mrb[0].mxu0
        %930 = vmatprep.mubr.bf16.mxu0 0
        %931 = vmatmul.mubr.bf16.gmra.mrb[0].mxu0 %v713
        %v932 = vpop.f32.mrb[0].mxu0
        %v933 = vadd.f32 %v632, %v932
        %v934 = vpop.f32.mrb[0].mxu0
        %v935 = vpop.f32.mrb[0].mxu0
        %v936 = vadd.f32 %v632, %v935
        %v937 = vpop.f32.mrb[0].mxu0
        %938 = vdwg.mxu0
        %v939 = vpack.c.bf16 %v816, %v813
        %v940 = vpack.c.bf16 %v824, %v821
        %v941 = vpack.c.bf16 %v832, %v829
        %v942 = vpack.c.bf16 %v840, %v837
        %v943 = vpack.c.bf16 %v848, %v845
        %v944 = vpack.c.bf16 %v856, %v853
        %v945 = vpack.c.bf16 %v864, %v861
        %v946 = vpack.c.bf16 %v872, %v869
        %v947 = vpack.c.bf16 %v880, %v877
        %v948 = vpack.c.bf16 %v888, %v885
        %v949 = vpack.c.bf16 %v896, %v893
        %v950 = vpack.c.bf16 %v904, %v901
        %v951 = vpack.c.bf16 %v912, %v909
        %v952 = vpack.c.bf16 %v920, %v917
        %v953 = vpack.c.bf16 %v928, %v925
        %v954 = vpack.c.bf16 %v936, %v933
        %v963 = vunpack.c.l.b16 %v547
        %v964 = vunpack.c.l.b16 %v548
        %v965 = vunpack.c.l.b16 %v549
        %v966 = vunpack.c.l.b16 %v550
        %v967 = vunpack.c.l.b16 %v551
        %v968 = vunpack.c.l.b16 %v552
        %v969 = vunpack.c.l.b16 %v553
        %v970 = vunpack.c.l.b16 %v554
        %v971 = vpack.c.b16 %v964, %v963
        %v972 = vpack.c.b16 %v966, %v965
        %v973 = vpack.c.b16 %v968, %v967
        %v974 = vpack.c.b16 %v970, %v969
        %vm975 = vcmask 523264
        %v977 = vsel %vm975, %v971, 0
        %v980 = vsel %vm975, %v972, 0
        %v983 = vsel %vm975, %v973, 0
        %v986 = vsel %vm975, %v974, 0
        %988 = vmatprep.subr.bf16.mxu0 0
        %989 = vmatpush1.bf16.msra.mxu0 %v939
        %990 = vmatprep.subr.bf16.mxu0 0
        %991 = vmatpush1.bf16.msra.mxu0 %v940
        %992 = vmatprep.subr.bf16.mxu0 0
        %993 = vmatpush1.bf16.msra.mxu0 %v941
        %994 = vmatprep.subr.bf16.mxu0 0
        %995 = vmatpush1.bf16.msra.mxu0 %v942
        %996 = vmatprep.subr.bf16.mxu0 0
        %997 = vmatpush1.bf16.msra.mxu0 0
        %998 = vmatprep.subr.bf16.mxu0 0
        %999 = vmatpush1.bf16.msra.mxu0 0
        %1000 = vmatprep.subr.bf16.mxu0 0
        %1001 = vmatpush1.bf16.msra.mxu0 0
        %1002 = vmatprep.subr.bf16.mxu0 0
        %1003 = vmatpush1.bf16.msra.mxu0 0
        %1004 = vmatprep.subr.bf16.mxu0 0
        %1005 = vmatpush1.bf16.msra.mxu0 0
        %1006 = vmatprep.subr.bf16.mxu0 0
        %1007 = vmatpush1.bf16.msra.mxu0 0
        %1008 = vmatprep.subr.bf16.mxu0 0
        %1009 = vmatpush1.bf16.msra.mxu0 0
        %1010 = vmatprep.subr.bf16.mxu0 0
        %1011 = vmatpush1.bf16.msra.mxu0 0
        %1012 = vmatprep.subr.bf16.mxu0 0
        %1013 = vmatpush1.bf16.msra.mxu0 0
        %1014 = vmatprep.subr.bf16.mxu0 0
        %1015 = vmatpush1.bf16.msra.mxu0 0
        %1016 = vmatprep.subr.bf16.mxu0 0
        %1017 = vmatpush1.bf16.msra.mxu0 0
        %1018 = vmatprep.subr.bf16.mxu0 0
        %1019 = vmatpush1.bf16.msra.mxu0 0
        %1020 = vmatprep.mubr.bf16.mxu0 0
        %1021 = vmatmul.mubr.bf16.gmra.mrb[0].mxu0 %v977
        %v1022 = vpop.f32.mrb[0].mxu0
        %v1023 = vadd.f32 0.0, %v1022
        %v1024 = vpop.f32.mrb[0].mxu0
        %v1025 = vpop.f32.mrb[0].mxu0
        %v1026 = vadd.f32 0.0, %v1025
        %v1027 = vpop.f32.mrb[0].mxu0
        %1028 = vmatprep.mubr.bf16.mxu0 0
        %1029 = vmatmul.mubr.bf16.gmra.mrb[0].mxu0 %v980
        %v1030 = vpop.f32.mrb[0].mxu0
        %v1031 = vadd.f32 0.0, %v1030
        %v1032 = vpop.f32.mrb[0].mxu0
        %v1033 = vpop.f32.mrb[0].mxu0
        %v1034 = vadd.f32 0.0, %v1033
        %v1035 = vpop.f32.mrb[0].mxu0
        %1036 = vmatprep.mubr.bf16.mxu0 0
        %1037 = vmatmul.mubr.bf16.gmra.mrb[0].mxu0 %v983
        %v1038 = vpop.f32.mrb[0].mxu0
        %v1039 = vadd.f32 0.0, %v1038
        %v1040 = vpop.f32.mrb[0].mxu0
        %v1041 = vpop.f32.mrb[0].mxu0
        %v1042 = vadd.f32 0.0, %v1041
        %v1043 = vpop.f32.mrb[0].mxu0
        %1044 = vmatprep.mubr.bf16.mxu0 0
        %1045 = vmatmul.mubr.bf16.gmra.mrb[0].mxu0 %v986
        %v1046 = vpop.f32.mrb[0].mxu0
        %v1047 = vadd.f32 0.0, %v1046
        %v1048 = vpop.f32.mrb[0].mxu0
        %v1049 = vpop.f32.mrb[0].mxu0
        %v1050 = vadd.f32 0.0, %v1049
        %v1051 = vpop.f32.mrb[0].mxu0
        %1052 = vdwg.mxu0
        %v1061 = vunpack.c.l.b16 %v555
        %v1062 = vunpack.c.l.b16 %v556
        %v1063 = vunpack.c.l.b16 %v557
        %v1064 = vunpack.c.l.b16 %v558
        %v1065 = vunpack.c.l.b16 %v559
        %v1066 = vunpack.c.l.b16 %v560
        %v1067 = vunpack.c.l.b16 %v561
        %v1068 = vunpack.c.l.b16 %v562
        %v1069 = vpack.c.b16 %v1062, %v1061
        %v1070 = vpack.c.b16 %v1064, %v1063
        %v1071 = vpack.c.b16 %v1066, %v1065
        %v1072 = vpack.c.b16 %v1068, %v1067
        %v1074 = vsel %vm975, %v1069, 0
        %v1077 = vsel %vm975, %v1070, 0
        %v1080 = vsel %vm975, %v1071, 0
        %v1083 = vsel %vm975, %v1072, 0
        %1085 = vmatprep.subr.bf16.mxu0 0
        %1086 = vmatpush1.bf16.msra.mxu0 %v943
        %1087 = vmatprep.subr.bf16.mxu0 0
        %1088 = vmatpush1.bf16.msra.mxu0 %v944
        %1089 = vmatprep.subr.bf16.mxu0 0
        %1090 = vmatpush1.bf16.msra.mxu0 %v945
        %1091 = vmatprep.subr.bf16.mxu0 0
        %1092 = vmatpush1.bf16.msra.mxu0 %v946
        %1093 = vmatprep.subr.bf16.mxu0 0
        %1094 = vmatpush1.bf16.msra.mxu0 0
        %1095 = vmatprep.subr.bf16.mxu0 0
        %1096 = vmatpush1.bf16.msra.mxu0 0
        %1097 = vmatprep.subr.bf16.mxu0 0
        %1098 = vmatpush1.bf16.msra.mxu0 0
        %1099 = vmatprep.subr.bf16.mxu0 0
        %1100 = vmatpush1.bf16.msra.mxu0 0
        %1101 = vmatprep.subr.bf16.mxu0 0
        %1102 = vmatpush1.bf16.msra.mxu0 0
        %1103 = vmatprep.subr.bf16.mxu0 0
        %1104 = vmatpush1.bf16.msra.mxu0 0
        %1105 = vmatprep.subr.bf16.mxu0 0
        %1106 = vmatpush1.bf16.msra.mxu0 0
        %1107 = vmatprep.subr.bf16.mxu0 0
        %1108 = vmatpush1.bf16.msra.mxu0 0
        %1109 = vmatprep.subr.bf16.mxu0 0
        %1110 = vmatpush1.bf16.msra.mxu0 0
        %1111 = vmatprep.subr.bf16.mxu0 0
        %1112 = vmatpush1.bf16.msra.mxu0 0
        %1113 = vmatprep.subr.bf16.mxu0 0
        %1114 = vmatpush1.bf16.msra.mxu0 0
        %1115 = vmatprep.subr.bf16.mxu0 0
        %1116 = vmatpush1.bf16.msra.mxu0 0
        %1117 = vmatprep.mubr.bf16.mxu0 0
        %1118 = vmatmul.mubr.bf16.gmra.mrb[0].mxu0 %v1074
        %v1119 = vpop.f32.mrb[0].mxu0
        %v1120 = vadd.f32 0.0, %v1119
        %v1121 = vpop.f32.mrb[0].mxu0
        %v1122 = vpop.f32.mrb[0].mxu0
        %v1123 = vadd.f32 0.0, %v1122
        %v1124 = vpop.f32.mrb[0].mxu0
        %1125 = vmatprep.mubr.bf16.mxu0 0
        %1126 = vmatmul.mubr.bf16.gmra.mrb[0].mxu0 %v1077
        %v1127 = vpop.f32.mrb[0].mxu0
        %v1128 = vadd.f32 0.0, %v1127
        %v1129 = vpop.f32.mrb[0].mxu0
        %v1130 = vpop.f32.mrb[0].mxu0
        %v1131 = vadd.f32 0.0, %v1130
        %v1132 = vpop.f32.mrb[0].mxu0
        %1133 = vmatprep.mubr.bf16.mxu0 0
        %1134 = vmatmul.mubr.bf16.gmra.mrb[0].mxu0 %v1080
        %v1135 = vpop.f32.mrb[0].mxu0
        %v1136 = vadd.f32 0.0, %v1135
        %v1137 = vpop.f32.mrb[0].mxu0
        %v1138 = vpop.f32.mrb[0].mxu0
        %v1139 = vadd.f32 0.0, %v1138
        %v1140 = vpop.f32.mrb[0].mxu0
        %1141 = vmatprep.mubr.bf16.mxu0 0
        %1142 = vmatmul.mubr.bf16.gmra.mrb[0].mxu0 %v1083
        %v1143 = vpop.f32.mrb[0].mxu0
        %v1144 = vadd.f32 0.0, %v1143
        %v1145 = vpop.f32.mrb[0].mxu0
        %v1146 = vpop.f32.mrb[0].mxu0
        %v1147 = vadd.f32 0.0, %v1146
        %v1148 = vpop.f32.mrb[0].mxu0
        %1149 = vdwg.mxu0
        %v1158 = vunpack.c.l.b16 %v563
        %v1159 = vunpack.c.l.b16 %v564
        %v1160 = vunpack.c.l.b16 %v565
        %v1161 = vunpack.c.l.b16 %v566
        %v1162 = vunpack.c.l.b16 %v567
        %v1163 = vunpack.c.l.b16 %v568
        %v1164 = vunpack.c.l.b16 %v569
        %v1165 = vunpack.c.l.b16 %v570
        %v1166 = vpack.c.b16 %v1159, %v1158
        %v1167 = vpack.c.b16 %v1161, %v1160
        %v1168 = vpack.c.b16 %v1163, %v1162
        %v1169 = vpack.c.b16 %v1165, %v1164
        %v1171 = vsel %vm975, %v1166, 0
        %v1174 = vsel %vm975, %v1167, 0
        %v1177 = vsel %vm975, %v1168, 0
        %v1180 = vsel %vm975, %v1169, 0
        %1182 = vmatprep.subr.bf16.mxu0 0
        %1183 = vmatpush1.bf16.msra.mxu0 %v947
        %1184 = vmatprep.subr.bf16.mxu0 0
        %1185 = vmatpush1.bf16.msra.mxu0 %v948
        %1186 = vmatprep.subr.bf16.mxu0 0
        %1187 = vmatpush1.bf16.msra.mxu0 %v949
        %1188 = vmatprep.subr.bf16.mxu0 0
        %1189 = vmatpush1.bf16.msra.mxu0 %v950
        %1190 = vmatprep.subr.bf16.mxu0 0
        %1191 = vmatpush1.bf16.msra.mxu0 0
        %1192 = vmatprep.subr.bf16.mxu0 0
        %1193 = vmatpush1.bf16.msra.mxu0 0
        %1194 = vmatprep.subr.bf16.mxu0 0
        %1195 = vmatpush1.bf16.msra.mxu0 0
        %1196 = vmatprep.subr.bf16.mxu0 0
        %1197 = vmatpush1.bf16.msra.mxu0 0
        %1198 = vmatprep.subr.bf16.mxu0 0
        %1199 = vmatpush1.bf16.msra.mxu0 0
        %1200 = vmatprep.subr.bf16.mxu0 0
        %1201 = vmatpush1.bf16.msra.mxu0 0
        %1202 = vmatprep.subr.bf16.mxu0 0
        %1203 = vmatpush1.bf16.msra.mxu0 0
        %1204 = vmatprep.subr.bf16.mxu0 0
        %1205 = vmatpush1.bf16.msra.mxu0 0
        %1206 = vmatprep.subr.bf16.mxu0 0
        %1207 = vmatpush1.bf16.msra.mxu0 0
        %1208 = vmatprep.subr.bf16.mxu0 0
        %1209 = vmatpush1.bf16.msra.mxu0 0
        %1210 = vmatprep.subr.bf16.mxu0 0
        %1211 = vmatpush1.bf16.msra.mxu0 0
        %1212 = vmatprep.subr.bf16.mxu0 0
        %1213 = vmatpush1.bf16.msra.mxu0 0
        %1214 = vmatprep.mubr.bf16.mxu0 0
        %1215 = vmatmul.mubr.bf16.gmra.mrb[0].mxu0 %v1171
        %v1216 = vpop.f32.mrb[0].mxu0
        %v1217 = vadd.f32 0.0, %v1216
        %v1218 = vpop.f32.mrb[0].mxu0
        %v1219 = vpop.f32.mrb[0].mxu0
        %v1220 = vadd.f32 0.0, %v1219
        %v1221 = vpop.f32.mrb[0].mxu0
        %1222 = vmatprep.mubr.bf16.mxu0 0
        %1223 = vmatmul.mubr.bf16.gmra.mrb[0].mxu0 %v1174
        %v1224 = vpop.f32.mrb[0].mxu0
        %v1225 = vadd.f32 0.0, %v1224
        %v1226 = vpop.f32.mrb[0].mxu0
        %v1227 = vpop.f32.mrb[0].mxu0
        %v1228 = vadd.f32 0.0, %v1227
        %v1229 = vpop.f32.mrb[0].mxu0
        %1230 = vmatprep.mubr.bf16.mxu0 0
        %1231 = vmatmul.mubr.bf16.gmra.mrb[0].mxu0 %v1177
        %v1232 = vpop.f32.mrb[0].mxu0
        %v1233 = vadd.f32 0.0, %v1232
        %v1234 = vpop.f32.mrb[0].mxu0
        %v1235 = vpop.f32.mrb[0].mxu0
        %v1236 = vadd.f32 0.0, %v1235
        %v1237 = vpop.f32.mrb[0].mxu0
        %1238 = vmatprep.mubr.bf16.mxu0 0
        %1239 = vmatmul.mubr.bf16.gmra.mrb[0].mxu0 %v1180
        %v1240 = vpop.f32.mrb[0].mxu0
        %v1241 = vadd.f32 0.0, %v1240
        %v1242 = vpop.f32.mrb[0].mxu0
        %v1243 = vpop.f32.mrb[0].mxu0
        %v1244 = vadd.f32 0.0, %v1243
        %v1245 = vpop.f32.mrb[0].mxu0
        %1246 = vdwg.mxu0
        %v1255 = vunpack.c.l.b16 %v571
        %v1256 = vunpack.c.l.b16 %v572
        %v1257 = vunpack.c.l.b16 %v573
        %v1258 = vunpack.c.l.b16 %v574
        %v1259 = vunpack.c.l.b16 %v575
        %v1260 = vunpack.c.l.b16 %v576
        %v1261 = vunpack.c.l.b16 %v577
        %v1262 = vunpack.c.l.b16 %v578
        %v1263 = vpack.c.b16 %v1256, %v1255
        %v1264 = vpack.c.b16 %v1258, %v1257
        %v1265 = vpack.c.b16 %v1260, %v1259
        %v1266 = vpack.c.b16 %v1262, %v1261
        %v1268 = vsel %vm975, %v1263, 0
        %v1271 = vsel %vm975, %v1264, 0
        %v1274 = vsel %vm975, %v1265, 0
        %v1277 = vsel %vm975, %v1266, 0
        %1279 = vmatprep.subr.bf16.mxu0 0
        %1280 = vmatpush1.bf16.msra.mxu0 %v951
        %1281 = vmatprep.subr.bf16.mxu0 0
        %1282 = vmatpush1.bf16.msra.mxu0 %v952
        %1283 = vmatprep.subr.bf16.mxu0 0
        %1284 = vmatpush1.bf16.msra.mxu0 %v953
        %1285 = vmatprep.subr.bf16.mxu0 0
        %1286 = vmatpush1.bf16.msra.mxu0 %v954
        %1287 = vmatprep.subr.bf16.mxu0 0
        %1288 = vmatpush1.bf16.msra.mxu0 0
        %1289 = vmatprep.subr.bf16.mxu0 0
        %1290 = vmatpush1.bf16.msra.mxu0 0
        %1291 = vmatprep.subr.bf16.mxu0 0
        %1292 = vmatpush1.bf16.msra.mxu0 0
        %1293 = vmatprep.subr.bf16.mxu0 0
        %1294 = vmatpush1.bf16.msra.mxu0 0
        %1295 = vmatprep.subr.bf16.mxu0 0
        %1296 = vmatpush1.bf16.msra.mxu0 0
        %1297 = vmatprep.subr.bf16.mxu0 0
        %1298 = vmatpush1.bf16.msra.mxu0 0
        %1299 = vmatprep.subr.bf16.mxu0 0
        %1300 = vmatpush1.bf16.msra.mxu0 0
        %1301 = vmatprep.subr.bf16.mxu0 0
        %1302 = vmatpush1.bf16.msra.mxu0 0
        %1303 = vmatprep.subr.bf16.mxu0 0
        %1304 = vmatpush1.bf16.msra.mxu0 0
        %1305 = vmatprep.subr.bf16.mxu0 0
        %1306 = vmatpush1.bf16.msra.mxu0 0
        %1307 = vmatprep.subr.bf16.mxu0 0
        %1308 = vmatpush1.bf16.msra.mxu0 0
        %1309 = vmatprep.subr.bf16.mxu0 0
        %1310 = vmatpush1.bf16.msra.mxu0 0
        %1311 = vmatprep.mubr.bf16.mxu0 0
        %1312 = vmatmul.mubr.bf16.gmra.mrb[0].mxu0 %v1268
        %v1313 = vpop.f32.mrb[0].mxu0
        %v1314 = vadd.f32 0.0, %v1313
        %v1315 = vpop.f32.mrb[0].mxu0
        %v1316 = vpop.f32.mrb[0].mxu0
        %v1317 = vadd.f32 0.0, %v1316
        %v1318 = vpop.f32.mrb[0].mxu0
        %1319 = vmatprep.mubr.bf16.mxu0 0
        %1320 = vmatmul.mubr.bf16.gmra.mrb[0].mxu0 %v1271
        %v1321 = vpop.f32.mrb[0].mxu0
        %v1322 = vadd.f32 0.0, %v1321
        %v1323 = vpop.f32.mrb[0].mxu0
        %v1324 = vpop.f32.mrb[0].mxu0
        %v1325 = vadd.f32 0.0, %v1324
        %v1326 = vpop.f32.mrb[0].mxu0
        %1327 = vmatprep.mubr.bf16.mxu0 0
        %1328 = vmatmul.mubr.bf16.gmra.mrb[0].mxu0 %v1274
        %v1329 = vpop.f32.mrb[0].mxu0
        %v1330 = vadd.f32 0.0, %v1329
        %v1331 = vpop.f32.mrb[0].mxu0
        %v1332 = vpop.f32.mrb[0].mxu0
        %v1333 = vadd.f32 0.0, %v1332
        %v1334 = vpop.f32.mrb[0].mxu0
        %1335 = vmatprep.mubr.bf16.mxu0 0
        %1336 = vmatmul.mubr.bf16.gmra.mrb[0].mxu0 %v1277
        %v1337 = vpop.f32.mrb[0].mxu0
        %v1338 = vadd.f32 0.0, %v1337
        %v1339 = vpop.f32.mrb[0].mxu0
        %v1340 = vpop.f32.mrb[0].mxu0
        %v1341 = vadd.f32 0.0, %v1340
        %v1342 = vpop.f32.mrb[0].mxu0
        %1343 = vdwg.mxu0
        %v1344 = vmax.f32 %v1023, 0.0
        %v1345 = vmax.f32 %v1026, 0.0
        %v1346 = vmax.f32 %v1031, 0.0
        %v1347 = vmax.f32 %v1034, 0.0
        %v1348 = vmax.f32 %v1039, 0.0
        %v1349 = vmax.f32 %v1042, 0.0
        %v1350 = vmax.f32 %v1047, 0.0
        %v1351 = vmax.f32 %v1050, 0.0
        %v1352 = vmax.f32 %v1120, 0.0
        %v1353 = vmax.f32 %v1123, 0.0
        %v1354 = vmax.f32 %v1128, 0.0
        %v1355 = vmax.f32 %v1131, 0.0
        %v1356 = vmax.f32 %v1136, 0.0
        %v1357 = vmax.f32 %v1139, 0.0
        %v1358 = vmax.f32 %v1144, 0.0
        %v1359 = vmax.f32 %v1147, 0.0
        %v1360 = vmax.f32 %v1217, 0.0
        %v1361 = vmax.f32 %v1220, 0.0
        %v1362 = vmax.f32 %v1225, 0.0
        %v1363 = vmax.f32 %v1228, 0.0
        %v1364 = vmax.f32 %v1233, 0.0
        %v1365 = vmax.f32 %v1236, 0.0
        %v1366 = vmax.f32 %v1241, 0.0
        %v1367 = vmax.f32 %v1244, 0.0
        %v1368 = vmax.f32 %v1314, 0.0
        %v1369 = vmax.f32 %v1317, 0.0
        %v1370 = vmax.f32 %v1322, 0.0
        %v1371 = vmax.f32 %v1325, 0.0
        %v1372 = vmax.f32 %v1330, 0.0
        %v1373 = vmax.f32 %v1333, 0.0
        %v1374 = vmax.f32 %v1338, 0.0
        %v1375 = vmax.f32 %v1341, 0.0
        %v1376 = vpack.c.bf16 %v1345, %v1344
        %v1377 = vpack.c.bf16 %v1347, %v1346
        %v1378 = vpack.c.bf16 %v1349, %v1348
        %v1379 = vpack.c.bf16 %v1351, %v1350
        %v1380 = vpack.c.bf16 %v1353, %v1352
        %v1381 = vpack.c.bf16 %v1355, %v1354
        %v1382 = vpack.c.bf16 %v1357, %v1356
        %v1383 = vpack.c.bf16 %v1359, %v1358
        %v1384 = vpack.c.bf16 %v1361, %v1360
        %v1385 = vpack.c.bf16 %v1363, %v1362
        %v1386 = vpack.c.bf16 %v1365, %v1364
        %v1387 = vpack.c.bf16 %v1367, %v1366
        %v1388 = vpack.c.bf16 %v1369, %v1368
        %v1389 = vpack.c.bf16 %v1371, %v1370
        %v1390 = vpack.c.bf16 %v1373, %v1372
        %v1391 = vpack.c.bf16 %v1375, %v1374
        %v1392 = vld [vmem:[#allocation10] sm:$0xf]
        %v1393 = vld [vmem:[#allocation10 + $0x4] sm:$0xf]
        %v1394 = vld [vmem:[#allocation10 + $0x8] sm:$0xf]
        %v1395 = vld [vmem:[#allocation10 + $0xc] sm:$0xf]
        %v1396 = vld [vmem:[#allocation10 + $0x10] sm:$0xf]
        %v1397 = vld [vmem:[#allocation10 + $0x14] sm:$0xf]
        %v1398 = vld [vmem:[#allocation10 + $0x18] sm:$0xf]
        %v1399 = vld [vmem:[#allocation10 + $0x1c] sm:$0xf]
        %v1400 = vld [vmem:[#allocation10 + $0x20] sm:$0xf]
        %v1401 = vld [vmem:[#allocation10 + $0x24] sm:$0xf]
        %v1402 = vld [vmem:[#allocation10 + $0x28] sm:$0xf]
        %v1403 = vld [vmem:[#allocation10 + $0x2c] sm:$0xf]
        %v1404 = vld [vmem:[#allocation10 + $0x30] sm:$0xf]
        %v1405 = vld [vmem:[#allocation10 + $0x34] sm:$0xf]
        %v1406 = vld [vmem:[#allocation10 + $0x38] sm:$0xf]
        %v1407 = vld [vmem:[#allocation10 + $0x3c] sm:$0xf]
        %v1408 = vld [vmem:[%s6] sm:$0x1]
        %v1410 = vlaneseq
        %v1411 = vshrl.u32 %v1410, 7
        %v1412 = vsub.s32 0, %v1411
        %v1413 = vrot.slane %v1408, %v1412
        %v1431 = vunpack.c.l.b16 %v1392
        %v1432 = vunpack.c.l.b16 %v1393
        %v1433 = vunpack.c.l.b16 %v1394
        %v1434 = vunpack.c.l.b16 %v1395
        %v1435 = vunpack.c.l.b16 %v1396
        %v1436 = vunpack.c.l.b16 %v1397
        %v1437 = vunpack.c.l.b16 %v1398
        %v1438 = vunpack.c.l.b16 %v1399
        %v1439 = vunpack.c.l.b16 %v1400
        %v1440 = vunpack.c.l.b16 %v1401
        %v1441 = vunpack.c.l.b16 %v1402
        %v1442 = vunpack.c.l.b16 %v1403
        %v1443 = vunpack.c.l.b16 %v1404
        %v1444 = vunpack.c.l.b16 %v1405
        %v1445 = vunpack.c.l.b16 %v1406
        %v1446 = vunpack.c.l.b16 %v1407
        %v1447 = vpack.c.b16 %v1432, %v1431
        %v1448 = vpack.c.b16 %v1434, %v1433
        %v1449 = vpack.c.b16 %v1436, %v1435
        %v1450 = vpack.c.b16 %v1438, %v1437
        %v1451 = vpack.c.b16 %v1440, %v1439
        %v1452 = vpack.c.b16 %v1442, %v1441
        %v1453 = vpack.c.b16 %v1444, %v1443
        %v1454 = vpack.c.b16 %v1446, %v1445
        %1463 = vmatprep.subr.bf16.mxu0 0
        %1464 = vmatpush1.bf16.msra.mxu0 %v1447
        %1465 = vmatprep.subr.bf16.mxu0 0
        %1466 = vmatpush1.bf16.msra.mxu0 %v1448
        %1467 = vmatprep.subr.bf16.mxu0 0
        %1468 = vmatpush1.bf16.msra.mxu0 %v1449
        %1469 = vmatprep.subr.bf16.mxu0 0
        %1470 = vmatpush1.bf16.msra.mxu0 %v1450
        %1471 = vmatprep.subr.bf16.mxu0 0
        %1472 = vmatpush1.bf16.msra.mxu0 %v1451
        %1473 = vmatprep.subr.bf16.mxu0 0
        %1474 = vmatpush1.bf16.msra.mxu0 %v1452
        %1475 = vmatprep.subr.bf16.mxu0 0
        %1476 = vmatpush1.bf16.msra.mxu0 %v1453
        %1477 = vmatprep.subr.bf16.mxu0 0
        %1478 = vmatpush1.bf16.msra.mxu0 %v1454
        %1479 = vmatprep.subr.bf16.mxu0 0
        %1480 = vmatpush1.bf16.msra.mxu0 0
        %1481 = vmatprep.subr.bf16.mxu0 0
        %1482 = vmatpush1.bf16.msra.mxu0 0
        %1483 = vmatprep.subr.bf16.mxu0 0
        %1484 = vmatpush1.bf16.msra.mxu0 0
        %1485 = vmatprep.subr.bf16.mxu0 0
        %1486 = vmatpush1.bf16.msra.mxu0 0
        %1487 = vmatprep.subr.bf16.mxu0 0
        %1488 = vmatpush1.bf16.msra.mxu0 0
        %1489 = vmatprep.subr.bf16.mxu0 0
        %1490 = vmatpush1.bf16.msra.mxu0 0
        %1491 = vmatprep.subr.bf16.mxu0 0
        %1492 = vmatpush1.bf16.msra.mxu0 0
        %1493 = vmatprep.subr.bf16.mxu0 0
        %1494 = vmatpush1.bf16.msra.mxu0 0
        %1495 = vmatprep.mubr.bf16.mxu0 0
        %1496 = vmatmul.mubr.bf16.gmra.mrb[0].mxu0 %v1376
        %v1497 = vpop.f32.mrb[0].mxu0
        %v1498 = vadd.f32 %v1413, %v1497
        %v1499 = vpop.f32.mrb[0].mxu0
        %v1500 = vpop.f32.mrb[0].mxu0
        %v1501 = vadd.f32 %v1413, %v1500
        %v1502 = vpop.f32.mrb[0].mxu0
        %1503 = vmatprep.mubr.bf16.mxu0 0
        %1504 = vmatmul.mubr.bf16.gmra.mrb[0].mxu0 %v1377
        %v1505 = vpop.f32.mrb[0].mxu0
        %v1506 = vadd.f32 %v1413, %v1505
        %v1507 = vpop.f32.mrb[0].mxu0
        %v1508 = vpop.f32.mrb[0].mxu0
        %v1509 = vadd.f32 %v1413, %v1508
        %v1510 = vpop.f32.mrb[0].mxu0
        %1511 = vmatprep.mubr.bf16.mxu0 0
        %1512 = vmatmul.mubr.bf16.gmra.mrb[0].mxu0 %v1378
        %v1513 = vpop.f32.mrb[0].mxu0
        %v1514 = vadd.f32 %v1413, %v1513
        %v1515 = vpop.f32.mrb[0].mxu0
        %v1516 = vpop.f32.mrb[0].mxu0
        %v1517 = vadd.f32 %v1413, %v1516
        %v1518 = vpop.f32.mrb[0].mxu0
        %1519 = vmatprep.mubr.bf16.mxu0 0
        %1520 = vmatmul.mubr.bf16.gmra.mrb[0].mxu0 %v1379
        %v1521 = vpop.f32.mrb[0].mxu0
        %v1522 = vadd.f32 %v1413, %v1521
        %v1523 = vpop.f32.mrb[0].mxu0
        %v1524 = vpop.f32.mrb[0].mxu0
        %v1525 = vadd.f32 %v1413, %v1524
        %v1526 = vpop.f32.mrb[0].mxu0
        %1527 = vmatprep.mubr.bf16.mxu0 0
        %1528 = vmatmul.mubr.bf16.gmra.mrb[0].mxu0 %v1380
        %v1529 = vpop.f32.mrb[0].mxu0
        %v1530 = vadd.f32 %v1413, %v1529
        %v1531 = vpop.f32.mrb[0].mxu0
        %v1532 = vpop.f32.mrb[0].mxu0
        %v1533 = vadd.f32 %v1413, %v1532
        %v1534 = vpop.f32.mrb[0].mxu0
        %1535 = vmatprep.mubr.bf16.mxu0 0
        %1536 = vmatmul.mubr.bf16.gmra.mrb[0].mxu0 %v1381
        %v1537 = vpop.f32.mrb[0].mxu0
        %v1538 = vadd.f32 %v1413, %v1537
        %v1539 = vpop.f32.mrb[0].mxu0
        %v1540 = vpop.f32.mrb[0].mxu0
        %v1541 = vadd.f32 %v1413, %v1540
        %v1542 = vpop.f32.mrb[0].mxu0
        %1543 = vmatprep.mubr.bf16.mxu0 0
        %1544 = vmatmul.mubr.bf16.gmra.mrb[0].mxu0 %v1382
        %v1545 = vpop.f32.mrb[0].mxu0
        %v1546 = vadd.f32 %v1413, %v1545
        %v1547 = vpop.f32.mrb[0].mxu0
        %v1548 = vpop.f32.mrb[0].mxu0
        %v1549 = vadd.f32 %v1413, %v1548
        %v1550 = vpop.f32.mrb[0].mxu0
        %1551 = vmatprep.mubr.bf16.mxu0 0
        %1552 = vmatmul.mubr.bf16.gmra.mrb[0].mxu0 %v1383
        %v1553 = vpop.f32.mrb[0].mxu0
        %v1554 = vadd.f32 %v1413, %v1553
        %v1555 = vpop.f32.mrb[0].mxu0
        %v1556 = vpop.f32.mrb[0].mxu0
        %v1557 = vadd.f32 %v1413, %v1556
        %v1558 = vpop.f32.mrb[0].mxu0
        %1559 = vmatprep.mubr.bf16.mxu0 0
        %1560 = vmatmul.mubr.bf16.gmra.mrb[0].mxu0 %v1384
        %v1561 = vpop.f32.mrb[0].mxu0
        %v1562 = vadd.f32 %v1413, %v1561
        %v1563 = vpop.f32.mrb[0].mxu0
        %v1564 = vpop.f32.mrb[0].mxu0
        %v1565 = vadd.f32 %v1413, %v1564
        %v1566 = vpop.f32.mrb[0].mxu0
        %1567 = vmatprep.mubr.bf16.mxu0 0
        %1568 = vmatmul.mubr.bf16.gmra.mrb[0].mxu0 %v1385
        %v1569 = vpop.f32.mrb[0].mxu0
        %v1570 = vadd.f32 %v1413, %v1569
        %v1571 = vpop.f32.mrb[0].mxu0
        %v1572 = vpop.f32.mrb[0].mxu0
        %v1573 = vadd.f32 %v1413, %v1572
        %v1574 = vpop.f32.mrb[0].mxu0
        %1575 = vmatprep.mubr.bf16.mxu0 0
        %1576 = vmatmul.mubr.bf16.gmra.mrb[0].mxu0 %v1386
        %v1577 = vpop.f32.mrb[0].mxu0
        %v1578 = vadd.f32 %v1413, %v1577
        %v1579 = vpop.f32.mrb[0].mxu0
        %v1580 = vpop.f32.mrb[0].mxu0
        %v1581 = vadd.f32 %v1413, %v1580
        %v1582 = vpop.f32.mrb[0].mxu0
        %1583 = vmatprep.mubr.bf16.mxu0 0
        %1584 = vmatmul.mubr.bf16.gmra.mrb[0].mxu0 %v1387
        %v1585 = vpop.f32.mrb[0].mxu0
        %v1586 = vadd.f32 %v1413, %v1585
        %v1587 = vpop.f32.mrb[0].mxu0
        %v1588 = vpop.f32.mrb[0].mxu0
        %v1589 = vadd.f32 %v1413, %v1588
        %v1590 = vpop.f32.mrb[0].mxu0
        %1591 = vmatprep.mubr.bf16.mxu0 0
        %1592 = vmatmul.mubr.bf16.gmra.mrb[0].mxu0 %v1388
        %v1593 = vpop.f32.mrb[0].mxu0
        %v1594 = vadd.f32 %v1413, %v1593
        %v1595 = vpop.f32.mrb[0].mxu0
        %v1596 = vpop.f32.mrb[0].mxu0
        %v1597 = vadd.f32 %v1413, %v1596
        %v1598 = vpop.f32.mrb[0].mxu0
        %1599 = vmatprep.mubr.bf16.mxu0 0
        %1600 = vmatmul.mubr.bf16.gmra.mrb[0].mxu0 %v1389
        %v1601 = vpop.f32.mrb[0].mxu0
        %v1602 = vadd.f32 %v1413, %v1601
        %v1603 = vpop.f32.mrb[0].mxu0
        %v1604 = vpop.f32.mrb[0].mxu0
        %v1605 = vadd.f32 %v1413, %v1604
        %v1606 = vpop.f32.mrb[0].mxu0
        %1607 = vmatprep.mubr.bf16.mxu0 0
        %1608 = vmatmul.mubr.bf16.gmra.mrb[0].mxu0 %v1390
        %v1609 = vpop.f32.mrb[0].mxu0
        %v1610 = vadd.f32 %v1413, %v1609
        %v1611 = vpop.f32.mrb[0].mxu0
        %v1612 = vpop.f32.mrb[0].mxu0
        %v1613 = vadd.f32 %v1413, %v1612
        %v1614 = vpop.f32.mrb[0].mxu0
        %1615 = vmatprep.mubr.bf16.mxu0 0
        %1616 = vmatmul.mubr.bf16.gmra.mrb[0].mxu0 %v1391
        %v1617 = vpop.f32.mrb[0].mxu0
        %v1618 = vadd.f32 %v1413, %v1617
        %v1619 = vpop.f32.mrb[0].mxu0
        %v1620 = vpop.f32.mrb[0].mxu0
        %v1621 = vadd.f32 %v1413, %v1620
        %v1622 = vpop.f32.mrb[0].mxu0
        %1623 = vdwg.mxu0
        %v1624 = vpack.c.bf16 %v1501, %v1498
        %v1625 = vpack.c.bf16 %v1509, %v1506
        %v1626 = vpack.c.bf16 %v1517, %v1514
        %v1627 = vpack.c.bf16 %v1525, %v1522
        %v1628 = vpack.c.bf16 %v1533, %v1530
        %v1629 = vpack.c.bf16 %v1541, %v1538
        %v1630 = vpack.c.bf16 %v1549, %v1546
        %v1631 = vpack.c.bf16 %v1557, %v1554
        %v1632 = vpack.c.bf16 %v1565, %v1562
        %v1633 = vpack.c.bf16 %v1573, %v1570
        %v1634 = vpack.c.bf16 %v1581, %v1578
        %v1635 = vpack.c.bf16 %v1589, %v1586
        %v1636 = vpack.c.bf16 %v1597, %v1594
        %v1637 = vpack.c.bf16 %v1605, %v1602
        %v1638 = vpack.c.bf16 %v1613, %v1610
        %v1639 = vpack.c.bf16 %v1621, %v1618
        %1640 = vmatprep.subr.bf16.mxu0 0
        %1641 = vmatpush1.bf16.msra.mxu0 %v1624
        %1642 = vmatprep.subr.bf16.mxu0 0
        %1643 = vmatpush1.bf16.msra.mxu0 %v1625
        %1644 = vmatprep.subr.bf16.mxu0 0
        %1645 = vmatpush1.bf16.msra.mxu0 %v1626
        %1646 = vmatprep.subr.bf16.mxu0 0
        %1647 = vmatpush1.bf16.msra.mxu0 %v1627
        %1648 = vmatprep.subr.bf16.mxu0 0
        %1649 = vmatpush1.bf16.msra.mxu0 0
        %1650 = vmatprep.subr.bf16.mxu0 0
        %1651 = vmatpush1.bf16.msra.mxu0 0
        %1652 = vmatprep.subr.bf16.mxu0 0
        %1653 = vmatpush1.bf16.msra.mxu0 0
        %1654 = vmatprep.subr.bf16.mxu0 0
        %1655 = vmatpush1.bf16.msra.mxu0 0
        %1656 = vmatprep.subr.bf16.mxu0 0
        %1657 = vmatpush1.bf16.msra.mxu0 0
        %1658 = vmatprep.subr.bf16.mxu0 0
        %1659 = vmatpush1.bf16.msra.mxu0 0
        %1660 = vmatprep.subr.bf16.mxu0 0
        %1661 = vmatpush1.bf16.msra.mxu0 0
        %1662 = vmatprep.subr.bf16.mxu0 0
        %1663 = vmatpush1.bf16.msra.mxu0 0
        %1664 = vmatprep.subr.bf16.mxu0 0
        %1665 = vmatpush1.bf16.msra.mxu0 0
        %1666 = vmatprep.subr.bf16.mxu0 0
        %1667 = vmatpush1.bf16.msra.mxu0 0
        %1668 = vmatprep.subr.bf16.mxu0 0
        %1669 = vmatpush1.bf16.msra.mxu0 0
        %1670 = vmatprep.subr.bf16.mxu0 0
        %1671 = vmatpush1.bf16.msra.mxu0 0
        %1672 = vmatprep.mubr.bf16.mxu0 0
        %1673 = vmatmul.mubr.bf16.gmra.mrb[0].mxu0 %v977
        %v1674 = vpop.f32.mrb[0].mxu0
        %v1675 = vadd.f32 0.0, %v1674
        %v1676 = vpop.f32.mrb[0].mxu0
        %v1677 = vpop.f32.mrb[0].mxu0
        %v1678 = vadd.f32 0.0, %v1677
        %v1679 = vpop.f32.mrb[0].mxu0
        %1680 = vmatprep.mubr.bf16.mxu0 0
        %1681 = vmatmul.mubr.bf16.gmra.mrb[0].mxu0 %v980
        %v1682 = vpop.f32.mrb[0].mxu0
        %v1683 = vadd.f32 0.0, %v1682
        %v1684 = vpop.f32.mrb[0].mxu0
        %v1685 = vpop.f32.mrb[0].mxu0
        %v1686 = vadd.f32 0.0, %v1685
        %v1687 = vpop.f32.mrb[0].mxu0
        %1688 = vmatprep.mubr.bf16.mxu0 0
        %1689 = vmatmul.mubr.bf16.gmra.mrb[0].mxu0 %v983
        %v1690 = vpop.f32.mrb[0].mxu0
        %v1691 = vadd.f32 0.0, %v1690
        %v1692 = vpop.f32.mrb[0].mxu0
        %v1693 = vpop.f32.mrb[0].mxu0
        %v1694 = vadd.f32 0.0, %v1693
        %v1695 = vpop.f32.mrb[0].mxu0
        %1696 = vmatprep.mubr.bf16.mxu0 0
        %1697 = vmatmul.mubr.bf16.gmra.mrb[0].mxu0 %v986
        %v1698 = vpop.f32.mrb[0].mxu0
        %v1699 = vadd.f32 0.0, %v1698
        %v1700 = vpop.f32.mrb[0].mxu0
        %v1701 = vpop.f32.mrb[0].mxu0
        %v1702 = vadd.f32 0.0, %v1701
        %v1703 = vpop.f32.mrb[0].mxu0
        %1704 = vdwg.mxu0
        %1705 = vmatprep.subr.bf16.mxu0 0
        %1706 = vmatpush1.bf16.msra.mxu0 %v1628
        %1707 = vmatprep.subr.bf16.mxu0 0
        %1708 = vmatpush1.bf16.msra.mxu0 %v1629
        %1709 = vmatprep.subr.bf16.mxu0 0
        %1710 = vmatpush1.bf16.msra.mxu0 %v1630
        %1711 = vmatprep.subr.bf16.mxu0 0
        %1712 = vmatpush1.bf16.msra.mxu0 %v1631
        %1713 = vmatprep.subr.bf16.mxu0 0
        %1714 = vmatpush1.bf16.msra.mxu0 0
        %1715 = vmatprep.subr.bf16.mxu0 0
        %1716 = vmatpush1.bf16.msra.mxu0 0
        %1717 = vmatprep.subr.bf16.mxu0 0
        %1718 = vmatpush1.bf16.msra.mxu0 0
        %1719 = vmatprep.subr.bf16.mxu0 0
        %1720 = vmatpush1.bf16.msra.mxu0 0
        %1721 = vmatprep.subr.bf16.mxu0 0
        %1722 = vmatpush1.bf16.msra.mxu0 0
        %1723 = vmatprep.subr.bf16.mxu0 0
        %1724 = vmatpush1.bf16.msra.mxu0 0
        %1725 = vmatprep.subr.bf16.mxu0 0
        %1726 = vmatpush1.bf16.msra.mxu0 0
        %1727 = vmatprep.subr.bf16.mxu0 0
        %1728 = vmatpush1.bf16.msra.mxu0 0
        %1729 = vmatprep.subr.bf16.mxu0 0
        %1730 = vmatpush1.bf16.msra.mxu0 0
        %1731 = vmatprep.subr.bf16.mxu0 0
        %1732 = vmatpush1.bf16.msra.mxu0 0
        %1733 = vmatprep.subr.bf16.mxu0 0
        %1734 = vmatpush1.bf16.msra.mxu0 0
        %1735 = vmatprep.subr.bf16.mxu0 0
        %1736 = vmatpush1.bf16.msra.mxu0 0
        %1737 = vmatprep.mubr.bf16.mxu0 0
        %1738 = vmatmul.mubr.bf16.gmra.mrb[0].mxu0 %v1074
        %v1739 = vpop.f32.mrb[0].mxu0
        %v1740 = vadd.f32 0.0, %v1739
        %v1741 = vpop.f32.mrb[0].mxu0
        %v1742 = vpop.f32.mrb[0].mxu0
        %v1743 = vadd.f32 0.0, %v1742
        %v1744 = vpop.f32.mrb[0].mxu0
        %1745 = vmatprep.mubr.bf16.mxu0 0
        %1746 = vmatmul.mubr.bf16.gmra.mrb[0].mxu0 %v1077
        %v1747 = vpop.f32.mrb[0].mxu0
        %v1748 = vadd.f32 0.0, %v1747
        %v1749 = vpop.f32.mrb[0].mxu0
        %v1750 = vpop.f32.mrb[0].mxu0
        %v1751 = vadd.f32 0.0, %v1750
        %v1752 = vpop.f32.mrb[0].mxu0
        %1753 = vmatprep.mubr.bf16.mxu0 0
        %1754 = vmatmul.mubr.bf16.gmra.mrb[0].mxu0 %v1080
        %v1755 = vpop.f32.mrb[0].mxu0
        %v1756 = vadd.f32 0.0, %v1755
        %v1757 = vpop.f32.mrb[0].mxu0
        %v1758 = vpop.f32.mrb[0].mxu0
        %v1759 = vadd.f32 0.0, %v1758
        %v1760 = vpop.f32.mrb[0].mxu0
        %1761 = vmatprep.mubr.bf16.mxu0 0
        %1762 = vmatmul.mubr.bf16.gmra.mrb[0].mxu0 %v1083
        %v1763 = vpop.f32.mrb[0].mxu0
        %v1764 = vadd.f32 0.0, %v1763
        %v1765 = vpop.f32.mrb[0].mxu0
        %v1766 = vpop.f32.mrb[0].mxu0
        %v1767 = vadd.f32 0.0, %v1766
        %v1768 = vpop.f32.mrb[0].mxu0
        %1769 = vdwg.mxu0
        %1770 = vmatprep.subr.bf16.mxu0 0
        %1771 = vmatpush1.bf16.msra.mxu0 %v1632
        %1772 = vmatprep.subr.bf16.mxu0 0
        %1773 = vmatpush1.bf16.msra.mxu0 %v1633
        %1774 = vmatprep.subr.bf16.mxu0 0
        %1775 = vmatpush1.bf16.msra.mxu0 %v1634
        %1776 = vmatprep.subr.bf16.mxu0 0
        %1777 = vmatpush1.bf16.msra.mxu0 %v1635
        %1778 = vmatprep.subr.bf16.mxu0 0
        %1779 = vmatpush1.bf16.msra.mxu0 0
        %1780 = vmatprep.subr.bf16.mxu0 0
        %1781 = vmatpush1.bf16.msra.mxu0 0
        %1782 = vmatprep.subr.bf16.mxu0 0
        %1783 = vmatpush1.bf16.msra.mxu0 0
        %1784 = vmatprep.subr.bf16.mxu0 0
        %1785 = vmatpush1.bf16.msra.mxu0 0
        %1786 = vmatprep.subr.bf16.mxu0 0
        %1787 = vmatpush1.bf16.msra.mxu0 0
        %1788 = vmatprep.subr.bf16.mxu0 0
        %1789 = vmatpush1.bf16.msra.mxu0 0
        %1790 = vmatprep.subr.bf16.mxu0 0
        %1791 = vmatpush1.bf16.msra.mxu0 0
        %1792 = vmatprep.subr.bf16.mxu0 0
        %1793 = vmatpush1.bf16.msra.mxu0 0
        %1794 = vmatprep.subr.bf16.mxu0 0
        %1795 = vmatpush1.bf16.msra.mxu0 0
        %1796 = vmatprep.subr.bf16.mxu0 0
        %1797 = vmatpush1.bf16.msra.mxu0 0
        %1798 = vmatprep.subr.bf16.mxu0 0
        %1799 = vmatpush1.bf16.msra.mxu0 0
        %1800 = vmatprep.subr.bf16.mxu0 0
        %1801 = vmatpush1.bf16.msra.mxu0 0
        %1802 = vmatprep.mubr.bf16.mxu0 0
        %1803 = vmatmul.mubr.bf16.gmra.mrb[0].mxu0 %v1171
        %v1804 = vpop.f32.mrb[0].mxu0
        %v1805 = vadd.f32 0.0, %v1804
        %v1806 = vpop.f32.mrb[0].mxu0
        %v1807 = vpop.f32.mrb[0].mxu0
        %v1808 = vadd.f32 0.0, %v1807
        %v1809 = vpop.f32.mrb[0].mxu0
        %1810 = vmatprep.mubr.bf16.mxu0 0
        %1811 = vmatmul.mubr.bf16.gmra.mrb[0].mxu0 %v1174
        %v1812 = vpop.f32.mrb[0].mxu0
        %v1813 = vadd.f32 0.0, %v1812
        %v1814 = vpop.f32.mrb[0].mxu0
        %v1815 = vpop.f32.mrb[0].mxu0
        %v1816 = vadd.f32 0.0, %v1815
        %v1817 = vpop.f32.mrb[0].mxu0
        %1818 = vmatprep.mubr.bf16.mxu0 0
        %1819 = vmatmul.mubr.bf16.gmra.mrb[0].mxu0 %v1177
        %v1820 = vpop.f32.mrb[0].mxu0
        %v1821 = vadd.f32 0.0, %v1820
        %v1822 = vpop.f32.mrb[0].mxu0
        %v1823 = vpop.f32.mrb[0].mxu0
        %v1824 = vadd.f32 0.0, %v1823
        %v1825 = vpop.f32.mrb[0].mxu0
        %1826 = vmatprep.mubr.bf16.mxu0 0
        %1827 = vmatmul.mubr.bf16.gmra.mrb[0].mxu0 %v1180
        %v1828 = vpop.f32.mrb[0].mxu0
        %v1829 = vadd.f32 0.0, %v1828
        %v1830 = vpop.f32.mrb[0].mxu0
        %v1831 = vpop.f32.mrb[0].mxu0
        %v1832 = vadd.f32 0.0, %v1831
        %v1833 = vpop.f32.mrb[0].mxu0
        %1834 = vdwg.mxu0
        %1835 = vmatprep.subr.bf16.mxu0 0
        %1836 = vmatpush1.bf16.msra.mxu0 %v1636
        %1837 = vmatprep.subr.bf16.mxu0 0
        %1838 = vmatpush1.bf16.msra.mxu0 %v1637
        %1839 = vmatprep.subr.bf16.mxu0 0
        %1840 = vmatpush1.bf16.msra.mxu0 %v1638
        %1841 = vmatprep.subr.bf16.mxu0 0
        %1842 = vmatpush1.bf16.msra.mxu0 %v1639
        %1843 = vmatprep.subr.bf16.mxu0 0
        %1844 = vmatpush1.bf16.msra.mxu0 0
        %1845 = vmatprep.subr.bf16.mxu0 0
        %1846 = vmatpush1.bf16.msra.mxu0 0
        %1847 = vmatprep.subr.bf16.mxu0 0
        %1848 = vmatpush1.bf16.msra.mxu0 0
        %1849 = vmatprep.subr.bf16.mxu0 0
        %1850 = vmatpush1.bf16.msra.mxu0 0
        %1851 = vmatprep.subr.bf16.mxu0 0
        %1852 = vmatpush1.bf16.msra.mxu0 0
        %1853 = vmatprep.subr.bf16.mxu0 0
        %1854 = vmatpush1.bf16.msra.mxu0 0
        %1855 = vmatprep.subr.bf16.mxu0 0
        %1856 = vmatpush1.bf16.msra.mxu0 0
        %1857 = vmatprep.subr.bf16.mxu0 0
        %1858 = vmatpush1.bf16.msra.mxu0 0
        %1859 = vmatprep.subr.bf16.mxu0 0
        %1860 = vmatpush1.bf16.msra.mxu0 0
        %1861 = vmatprep.subr.bf16.mxu0 0
        %1862 = vmatpush1.bf16.msra.mxu0 0
        %1863 = vmatprep.subr.bf16.mxu0 0
        %1864 = vmatpush1.bf16.msra.mxu0 0
        %1865 = vmatprep.subr.bf16.mxu0 0
        %1866 = vmatpush1.bf16.msra.mxu0 0
        %1867 = vmatprep.mubr.bf16.mxu0 0
        %1868 = vmatmul.mubr.bf16.gmra.mrb[0].mxu0 %v1268
        %v1869 = vpop.f32.mrb[0].mxu0
        %v1870 = vadd.f32 0.0, %v1869
        %v1871 = vpop.f32.mrb[0].mxu0
        %v1872 = vpop.f32.mrb[0].mxu0
        %v1873 = vadd.f32 0.0, %v1872
        %v1874 = vpop.f32.mrb[0].mxu0
        %1875 = vmatprep.mubr.bf16.mxu0 0
        %1876 = vmatmul.mubr.bf16.gmra.mrb[0].mxu0 %v1271
        %v1877 = vpop.f32.mrb[0].mxu0
        %v1878 = vadd.f32 0.0, %v1877
        %v1879 = vpop.f32.mrb[0].mxu0
        %v1880 = vpop.f32.mrb[0].mxu0
        %v1881 = vadd.f32 0.0, %v1880
        %v1882 = vpop.f32.mrb[0].mxu0
        %1883 = vmatprep.mubr.bf16.mxu0 0
        %1884 = vmatmul.mubr.bf16.gmra.mrb[0].mxu0 %v1274
        %v1885 = vpop.f32.mrb[0].mxu0
        %v1886 = vadd.f32 0.0, %v1885
        %v1887 = vpop.f32.mrb[0].mxu0
        %v1888 = vpop.f32.mrb[0].mxu0
        %v1889 = vadd.f32 0.0, %v1888
        %v1890 = vpop.f32.mrb[0].mxu0
        %1891 = vmatprep.mubr.bf16.mxu0 0
        %1892 = vmatmul.mubr.bf16.gmra.mrb[0].mxu0 %v1277
        %v1893 = vpop.f32.mrb[0].mxu0
        %v1894 = vadd.f32 0.0, %v1893
        %v1895 = vpop.f32.mrb[0].mxu0
        %v1896 = vpop.f32.mrb[0].mxu0
        %v1897 = vadd.f32 0.0, %v1896
        %v1898 = vpop.f32.mrb[0].mxu0
        %1899 = vdwg.mxu0
        %v1900 = vmax.f32 %v1675, 0.0
        %v1901 = vmax.f32 %v1678, 0.0
        %v1902 = vmax.f32 %v1683, 0.0
        %v1903 = vmax.f32 %v1686, 0.0
        %v1904 = vmax.f32 %v1691, 0.0
        %v1905 = vmax.f32 %v1694, 0.0
        %v1906 = vmax.f32 %v1699, 0.0
        %v1907 = vmax.f32 %v1702, 0.0
        %v1908 = vmax.f32 %v1740, 0.0
        %v1909 = vmax.f32 %v1743, 0.0
        %v1910 = vmax.f32 %v1748, 0.0
        %v1911 = vmax.f32 %v1751, 0.0
        %v1912 = vmax.f32 %v1756, 0.0
        %v1913 = vmax.f32 %v1759, 0.0
        %v1914 = vmax.f32 %v1764, 0.0
        %v1915 = vmax.f32 %v1767, 0.0
        %v1916 = vmax.f32 %v1805, 0.0
        %v1917 = vmax.f32 %v1808, 0.0
        %v1918 = vmax.f32 %v1813, 0.0
        %v1919 = vmax.f32 %v1816, 0.0
        %v1920 = vmax.f32 %v1821, 0.0
        %v1921 = vmax.f32 %v1824, 0.0
        %v1922 = vmax.f32 %v1829, 0.0
        %v1923 = vmax.f32 %v1832, 0.0
        %v1924 = vmax.f32 %v1870, 0.0
        %v1925 = vmax.f32 %v1873, 0.0
        %v1926 = vmax.f32 %v1878, 0.0
        %v1927 = vmax.f32 %v1881, 0.0
        %v1928 = vmax.f32 %v1886, 0.0
        %v1929 = vmax.f32 %v1889, 0.0
        %v1930 = vmax.f32 %v1894, 0.0
        %v1931 = vmax.f32 %v1897, 0.0
        %v1932 = vld [vmem:[%s477] sm:$0xf]
        %v1933 = vld [vmem:[%s477 + $0x4] sm:$0xf]
        %v1934 = vld [vmem:[%s477 + $0x8] sm:$0xf]
        %v1935 = vld [vmem:[%s477 + $0xc] sm:$0xf]
        %v1936 = vpack.c.bf16 %v1901, %v1900
        %v1937 = vpack.c.bf16 %v1903, %v1902
        %v1938 = vpack.c.bf16 %v1905, %v1904
        %v1939 = vpack.c.bf16 %v1907, %v1906
        %v1940 = vpack.c.bf16 %v1909, %v1908
        %v1941 = vpack.c.bf16 %v1911, %v1910
        %v1942 = vpack.c.bf16 %v1913, %v1912
        %v1943 = vpack.c.bf16 %v1915, %v1914
        %v1944 = vpack.c.bf16 %v1917, %v1916
        %v1945 = vpack.c.bf16 %v1919, %v1918
        %v1946 = vpack.c.bf16 %v1921, %v1920
        %v1947 = vpack.c.bf16 %v1923, %v1922
        %v1948 = vpack.c.bf16 %v1925, %v1924
        %v1949 = vpack.c.bf16 %v1927, %v1926
        %v1950 = vpack.c.bf16 %v1929, %v1928
        %v1951 = vpack.c.bf16 %v1931, %v1930
        %v1953 = vsel %vm975, %v1932, 0
        %1955 = vmatprep.subr.bf16.mxu0 0
        %1956 = vmatpush1.bf16.msra.mxu0 %v1936
        %1957 = vmatprep.subr.bf16.mxu0 0
        %1958 = vmatpush1.bf16.msra.mxu0 %v1937
        %1959 = vmatprep.subr.bf16.mxu0 0
        %1960 = vmatpush1.bf16.msra.mxu0 %v1938
        %1961 = vmatprep.subr.bf16.mxu0 0
        %1962 = vmatpush1.bf16.msra.mxu0 %v1939
        %1963 = vmatprep.subr.bf16.mxu0 0
        %1964 = vmatpush1.bf16.msra.mxu0 0
        %1965 = vmatprep.subr.bf16.mxu0 0
        %1966 = vmatpush1.bf16.msra.mxu0 0
        %1967 = vmatprep.subr.bf16.mxu0 0
        %1968 = vmatpush1.bf16.msra.mxu0 0
        %1969 = vmatprep.subr.bf16.mxu0 0
        %1970 = vmatpush1.bf16.msra.mxu0 0
        %1971 = vmatprep.subr.bf16.mxu0 0
        %1972 = vmatpush1.bf16.msra.mxu0 0
        %1973 = vmatprep.subr.bf16.mxu0 0
        %1974 = vmatpush1.bf16.msra.mxu0 0
        %1975 = vmatprep.subr.bf16.mxu0 0
        %1976 = vmatpush1.bf16.msra.mxu0 0
        %1977 = vmatprep.subr.bf16.mxu0 0
        %1978 = vmatpush1.bf16.msra.mxu0 0
        %1979 = vmatprep.subr.bf16.mxu0 0
        %1980 = vmatpush1.bf16.msra.mxu0 0
        %1981 = vmatprep.subr.bf16.mxu0 0
        %1982 = vmatpush1.bf16.msra.mxu0 0
        %1983 = vmatprep.subr.bf16.mxu0 0
        %1984 = vmatpush1.bf16.msra.mxu0 0
        %1985 = vmatprep.subr.bf16.mxu0 0
        %1986 = vmatpush1.bf16.msra.mxu0 0
        %1987 = vmatprep.mubr.bf16.mxu0 0
        %1988 = vmatmul.mubr.bf16.gmra.mrb[0].mxu0 %v1953
        %v1989 = vpop.f32.mrb[0].mxu0
        %v1990 = vadd.f32 0.0, %v1989
        %v1991 = vpop.f32.mrb[0].mxu0
        %v1992 = vpop.f32.mrb[0].mxu0
        %v1993 = vpop.f32.mrb[0].mxu0
        %1994 = vdwg.mxu0
        %v1996 = vsel %vm975, %v1933, 0
        %1998 = vmatprep.subr.bf16.mxu0 0
        %1999 = vmatpush1.bf16.msra.mxu0 %v1940
        %2000 = vmatprep.subr.bf16.mxu0 0
        %2001 = vmatpush1.bf16.msra.mxu0 %v1941
        %2002 = vmatprep.subr.bf16.mxu0 0
        %2003 = vmatpush1.bf16.msra.mxu0 %v1942
        %2004 = vmatprep.subr.bf16.mxu0 0
        %2005 = vmatpush1.bf16.msra.mxu0 %v1943
        %2006 = vmatprep.subr.bf16.mxu0 0
        %2007 = vmatpush1.bf16.msra.mxu0 0
        %2008 = vmatprep.subr.bf16.mxu0 0
        %2009 = vmatpush1.bf16.msra.mxu0 0
        %2010 = vmatprep.subr.bf16.mxu0 0
        %2011 = vmatpush1.bf16.msra.mxu0 0
        %2012 = vmatprep.subr.bf16.mxu0 0
        %2013 = vmatpush1.bf16.msra.mxu0 0
        %2014 = vmatprep.subr.bf16.mxu0 0
        %2015 = vmatpush1.bf16.msra.mxu0 0
        %2016 = vmatprep.subr.bf16.mxu0 0
        %2017 = vmatpush1.bf16.msra.mxu0 0
        %2018 = vmatprep.subr.bf16.mxu0 0
        %2019 = vmatpush1.bf16.msra.mxu0 0
        %2020 = vmatprep.subr.bf16.mxu0 0
        %2021 = vmatpush1.bf16.msra.mxu0 0
        %2022 = vmatprep.subr.bf16.mxu0 0
        %2023 = vmatpush1.bf16.msra.mxu0 0
        %2024 = vmatprep.subr.bf16.mxu0 0
        %2025 = vmatpush1.bf16.msra.mxu0 0
        %2026 = vmatprep.subr.bf16.mxu0 0
        %2027 = vmatpush1.bf16.msra.mxu0 0
        %2028 = vmatprep.subr.bf16.mxu0 0
        %2029 = vmatpush1.bf16.msra.mxu0 0
        %2030 = vmatprep.mubr.bf16.mxu0 0
        %2031 = vmatmul.mubr.bf16.gmra.mrb[0].mxu0 %v1996
        %v2032 = vpop.f32.mrb[0].mxu0
        %v2033 = vadd.f32 0.0, %v2032
        %v2034 = vpop.f32.mrb[0].mxu0
        %v2035 = vpop.f32.mrb[0].mxu0
        %v2036 = vpop.f32.mrb[0].mxu0
        %2037 = vdwg.mxu0
        %v2039 = vsel %vm975, %v1934, 0
        %2041 = vmatprep.subr.bf16.mxu0 0
        %2042 = vmatpush1.bf16.msra.mxu0 %v1944
        %2043 = vmatprep.subr.bf16.mxu0 0
        %2044 = vmatpush1.bf16.msra.mxu0 %v1945
        %2045 = vmatprep.subr.bf16.mxu0 0
        %2046 = vmatpush1.bf16.msra.mxu0 %v1946
        %2047 = vmatprep.subr.bf16.mxu0 0
        %2048 = vmatpush1.bf16.msra.mxu0 %v1947
        %2049 = vmatprep.subr.bf16.mxu0 0
        %2050 = vmatpush1.bf16.msra.mxu0 0
        %2051 = vmatprep.subr.bf16.mxu0 0
        %2052 = vmatpush1.bf16.msra.mxu0 0
        %2053 = vmatprep.subr.bf16.mxu0 0
        %2054 = vmatpush1.bf16.msra.mxu0 0
        %2055 = vmatprep.subr.bf16.mxu0 0
        %2056 = vmatpush1.bf16.msra.mxu0 0
        %2057 = vmatprep.subr.bf16.mxu0 0
        %2058 = vmatpush1.bf16.msra.mxu0 0
        %2059 = vmatprep.subr.bf16.mxu0 0
        %2060 = vmatpush1.bf16.msra.mxu0 0
        %2061 = vmatprep.subr.bf16.mxu0 0
        %2062 = vmatpush1.bf16.msra.mxu0 0
        %2063 = vmatprep.subr.bf16.mxu0 0
        %2064 = vmatpush1.bf16.msra.mxu0 0
        %2065 = vmatprep.subr.bf16.mxu0 0
        %2066 = vmatpush1.bf16.msra.mxu0 0
        %2067 = vmatprep.subr.bf16.mxu0 0
        %2068 = vmatpush1.bf16.msra.mxu0 0
        %2069 = vmatprep.subr.bf16.mxu0 0
        %2070 = vmatpush1.bf16.msra.mxu0 0
        %2071 = vmatprep.subr.bf16.mxu0 0
        %2072 = vmatpush1.bf16.msra.mxu0 0
        %2073 = vmatprep.mubr.bf16.mxu0 0
        %2074 = vmatmul.mubr.bf16.gmra.mrb[0].mxu0 %v2039
        %v2075 = vpop.f32.mrb[0].mxu0
        %v2076 = vadd.f32 0.0, %v2075
        %v2077 = vpop.f32.mrb[0].mxu0
        %v2078 = vpop.f32.mrb[0].mxu0
        %v2079 = vpop.f32.mrb[0].mxu0
        %2080 = vdwg.mxu0
        %v2082 = vsel %vm975, %v1935, 0
        %2084 = vmatprep.subr.bf16.mxu0 0
        %2085 = vmatpush1.bf16.msra.mxu0 %v1948
        %2086 = vmatprep.subr.bf16.mxu0 0
        %2087 = vmatpush1.bf16.msra.mxu0 %v1949
        %2088 = vmatprep.subr.bf16.mxu0 0
        %2089 = vmatpush1.bf16.msra.mxu0 %v1950
        %2090 = vmatprep.subr.bf16.mxu0 0
        %2091 = vmatpush1.bf16.msra.mxu0 %v1951
        %2092 = vmatprep.subr.bf16.mxu0 0
        %2093 = vmatpush1.bf16.msra.mxu0 0
        %2094 = vmatprep.subr.bf16.mxu0 0
        %2095 = vmatpush1.bf16.msra.mxu0 0
        %2096 = vmatprep.subr.bf16.mxu0 0
        %2097 = vmatpush1.bf16.msra.mxu0 0
        %2098 = vmatprep.subr.bf16.mxu0 0
        %2099 = vmatpush1.bf16.msra.mxu0 0
        %2100 = vmatprep.subr.bf16.mxu0 0
        %2101 = vmatpush1.bf16.msra.mxu0 0
        %2102 = vmatprep.subr.bf16.mxu0 0
        %2103 = vmatpush1.bf16.msra.mxu0 0
        %2104 = vmatprep.subr.bf16.mxu0 0
        %2105 = vmatpush1.bf16.msra.mxu0 0
        %2106 = vmatprep.subr.bf16.mxu0 0
        %2107 = vmatpush1.bf16.msra.mxu0 0
        %2108 = vmatprep.subr.bf16.mxu0 0
        %2109 = vmatpush1.bf16.msra.mxu0 0
        %2110 = vmatprep.subr.bf16.mxu0 0
        %2111 = vmatpush1.bf16.msra.mxu0 0
        %2112 = vmatprep.subr.bf16.mxu0 0
        %2113 = vmatpush1.bf16.msra.mxu0 0
        %2114 = vmatprep.subr.bf16.mxu0 0
        %2115 = vmatpush1.bf16.msra.mxu0 0
        %2116 = vmatprep.mubr.bf16.mxu0 0
        %2117 = vmatmul.mubr.bf16.gmra.mrb[0].mxu0 %v2082
        %v2118 = vpop.f32.mrb[0].mxu0
        %v2119 = vadd.f32 0.0, %v2118
        %v2120 = vpop.f32.mrb[0].mxu0
        %v2121 = vpop.f32.mrb[0].mxu0
        %v2122 = vpop.f32.mrb[0].mxu0
        %2123 = vdwg.mxu0
        %v2124 = vpack.c.bf16 %v2033, %v1990
        %v2125 = vpack.c.bf16 %v2119, %v2076
        %v2126 = vld [vmem:[#allocation11] sm:$0xf]
        %v2127 = vld [vmem:[#allocation11 + $0x4] sm:$0xf]
        %v2128 = vld [vmem:[#allocation11 + $0x8] sm:$0xf]
        %v2129 = vld [vmem:[#allocation11 + $0xc] sm:$0xf]
        %v2130 = vld [vmem:[#allocation11 + $0x10] sm:$0xf]
        %v2131 = vld [vmem:[#allocation11 + $0x14] sm:$0xf]
        %v2132 = vld [vmem:[#allocation11 + $0x18] sm:$0xf]
        %v2133 = vld [vmem:[#allocation11 + $0x1c] sm:$0xf]
        %v2134 = vld [vmem:[#allocation11 + $0x20] sm:$0xf]
        %v2135 = vld [vmem:[#allocation11 + $0x24] sm:$0xf]
        %v2136 = vld [vmem:[#allocation11 + $0x28] sm:$0xf]
        %v2137 = vld [vmem:[#allocation11 + $0x2c] sm:$0xf]
        %v2138 = vld [vmem:[#allocation11 + $0x30] sm:$0xf]
        %v2139 = vld [vmem:[#allocation11 + $0x34] sm:$0xf]
        %v2140 = vld [vmem:[#allocation11 + $0x38] sm:$0xf]
        %v2141 = vld [vmem:[#allocation11 + $0x3c] sm:$0xf]
        %v2142 = vld [vmem:[%s8] sm:$0x1]
        %v2144 = vlaneseq
        %v2145 = vshrl.u32 %v2144, 7
        %v2146 = vsub.s32 0, %v2145
        %v2147 = vrot.slane %v2142, %v2146
        %v2165 = vunpack.c.l.b16 %v2126
        %v2166 = vunpack.c.l.b16 %v2127
        %v2167 = vunpack.c.l.b16 %v2128
        %v2168 = vunpack.c.l.b16 %v2129
        %v2169 = vunpack.c.l.b16 %v2130
        %v2170 = vunpack.c.l.b16 %v2131
        %v2171 = vunpack.c.l.b16 %v2132
        %v2172 = vunpack.c.l.b16 %v2133
        %v2173 = vunpack.c.l.b16 %v2134
        %v2174 = vunpack.c.l.b16 %v2135
        %v2175 = vunpack.c.l.b16 %v2136
        %v2176 = vunpack.c.l.b16 %v2137
        %v2177 = vunpack.c.l.b16 %v2138
        %v2178 = vunpack.c.l.b16 %v2139
        %v2179 = vunpack.c.l.b16 %v2140
        %v2180 = vunpack.c.l.b16 %v2141
        %v2181 = vpack.c.b16 %v2166, %v2165
        %v2182 = vpack.c.b16 %v2168, %v2167
        %v2183 = vpack.c.b16 %v2170, %v2169
        %v2184 = vpack.c.b16 %v2172, %v2171
        %v2185 = vpack.c.b16 %v2174, %v2173
        %v2186 = vpack.c.b16 %v2176, %v2175
        %v2187 = vpack.c.b16 %v2178, %v2177
        %v2188 = vpack.c.b16 %v2180, %v2179
        %2197 = vmatprep.subr.bf16.mxu0 0
        %2198 = vmatpush1.bf16.msra.mxu0 %v2181
        %2199 = vmatprep.subr.bf16.mxu0 0
        %2200 = vmatpush1.bf16.msra.mxu0 %v2182
        %2201 = vmatprep.subr.bf16.mxu0 0
        %2202 = vmatpush1.bf16.msra.mxu0 %v2183
        %2203 = vmatprep.subr.bf16.mxu0 0
        %2204 = vmatpush1.bf16.msra.mxu0 %v2184
        %2205 = vmatprep.subr.bf16.mxu0 0
        %2206 = vmatpush1.bf16.msra.mxu0 %v2185
        %2207 = vmatprep.subr.bf16.mxu0 0
        %2208 = vmatpush1.bf16.msra.mxu0 %v2186
        %2209 = vmatprep.subr.bf16.mxu0 0
        %2210 = vmatpush1.bf16.msra.mxu0 %v2187
        %2211 = vmatprep.subr.bf16.mxu0 0
        %2212 = vmatpush1.bf16.msra.mxu0 %v2188
        %2213 = vmatprep.subr.bf16.mxu0 0
        %2214 = vmatpush1.bf16.msra.mxu0 0
        %2215 = vmatprep.subr.bf16.mxu0 0
        %2216 = vmatpush1.bf16.msra.mxu0 0
        %2217 = vmatprep.subr.bf16.mxu0 0
        %2218 = vmatpush1.bf16.msra.mxu0 0
        %2219 = vmatprep.subr.bf16.mxu0 0
        %2220 = vmatpush1.bf16.msra.mxu0 0
        %2221 = vmatprep.subr.bf16.mxu0 0
        %2222 = vmatpush1.bf16.msra.mxu0 0
        %2223 = vmatprep.subr.bf16.mxu0 0
        %2224 = vmatpush1.bf16.msra.mxu0 0
        %2225 = vmatprep.subr.bf16.mxu0 0
        %2226 = vmatpush1.bf16.msra.mxu0 0
        %2227 = vmatprep.subr.bf16.mxu0 0
        %2228 = vmatpush1.bf16.msra.mxu0 0
        %2229 = vmatprep.mubr.bf16.mxu0 0
        %2230 = vmatmul.mubr.bf16.gmra.mrb[0].mxu0 %v2124
        %v2231 = vpop.f32.mrb[0].mxu0
        %v2232 = vadd.f32 %v2147, %v2231
        %v2233 = vpop.f32.mrb[0].mxu0
        %v2234 = vpop.f32.mrb[0].mxu0
        %v2235 = vadd.f32 %v2147, %v2234
        %v2236 = vpop.f32.mrb[0].mxu0
        %2237 = vmatprep.mubr.bf16.mxu0 0
        %2238 = vmatmul.mubr.bf16.gmra.mrb[0].mxu0 %v2125
        %v2239 = vpop.f32.mrb[0].mxu0
        %v2240 = vadd.f32 %v2147, %v2239
        %v2241 = vpop.f32.mrb[0].mxu0
        %v2242 = vpop.f32.mrb[0].mxu0
        %v2243 = vadd.f32 %v2147, %v2242
        %v2244 = vpop.f32.mrb[0].mxu0
        %2245 = vdwg.mxu0
        %v2246 = vmax.f32 %v2232, 0.0
        %v2247 = vmax.f32 %v2235, 0.0
        %v2248 = vmax.f32 %v2240, 0.0
        %v2249 = vmax.f32 %v2243, 0.0
        %v2250 = vpack.c.bf16 %v2247, %v2246
        %v2251 = vpack.c.bf16 %v2249, %v2248
        %v2252 = vld [vmem:[#allocation13] sm:$0xf]
        %v2253 = vld [vmem:[#allocation13 + $0x4] sm:$0xf]
        %v2254 = vld [vmem:[#allocation13 + $0x8] sm:$0xf]
        %v2255 = vld [vmem:[#allocation13 + $0xc] sm:$0xf]
        %v2256 = vld [vmem:[#allocation13 + $0x10] sm:$0xf]
        %v2257 = vld [vmem:[#allocation13 + $0x14] sm:$0xf]
        %v2258 = vld [vmem:[#allocation13 + $0x18] sm:$0xf]
        %v2259 = vld [vmem:[#allocation13 + $0x1c] sm:$0xf]
        %v2260 = vld [vmem:[#allocation13 + $0x20] sm:$0xf]
        %v2261 = vld [vmem:[#allocation13 + $0x24] sm:$0xf]
        %v2262 = vld [vmem:[#allocation13 + $0x28] sm:$0xf]
        %v2263 = vld [vmem:[#allocation13 + $0x2c] sm:$0xf]
        %v2264 = vld [vmem:[#allocation13 + $0x30] sm:$0xf]
        %v2265 = vld [vmem:[#allocation13 + $0x34] sm:$0xf]
        %v2266 = vld [vmem:[#allocation13 + $0x38] sm:$0xf]
        %v2267 = vld [vmem:[#allocation13 + $0x3c] sm:$0xf]
        %v2268 = vld [vmem:[%s10] sm:$0x1]
        %v2270 = vlaneseq
        %v2271 = vshrl.u32 %v2270, 7
        %v2272 = vsub.s32 0, %v2271
        %v2273 = vrot.slane %v2268, %v2272
        %v2291 = vunpack.c.l.b16 %v2252
        %v2292 = vunpack.c.l.b16 %v2253
        %v2293 = vunpack.c.l.b16 %v2254
        %v2294 = vunpack.c.l.b16 %v2255
        %v2295 = vunpack.c.l.b16 %v2256
        %v2296 = vunpack.c.l.b16 %v2257
        %v2297 = vunpack.c.l.b16 %v2258
        %v2298 = vunpack.c.l.b16 %v2259
        %v2299 = vunpack.c.l.b16 %v2260
        %v2300 = vunpack.c.l.b16 %v2261
        %v2301 = vunpack.c.l.b16 %v2262
        %v2302 = vunpack.c.l.b16 %v2263
        %v2303 = vunpack.c.l.b16 %v2264
        %v2304 = vunpack.c.l.b16 %v2265
        %v2305 = vunpack.c.l.b16 %v2266
        %v2306 = vunpack.c.l.b16 %v2267
        %v2307 = vpack.c.b16 %v2292, %v2291
        %v2308 = vpack.c.b16 %v2294, %v2293
        %v2309 = vpack.c.b16 %v2296, %v2295
        %v2310 = vpack.c.b16 %v2298, %v2297
        %v2311 = vpack.c.b16 %v2300, %v2299
        %v2312 = vpack.c.b16 %v2302, %v2301
        %v2313 = vpack.c.b16 %v2304, %v2303
        %v2314 = vpack.c.b16 %v2306, %v2305
        %2323 = vmatprep.subr.bf16.mxu0 0
        %2324 = vmatpush1.bf16.msra.mxu0 %v2307
        %2325 = vmatprep.subr.bf16.mxu0 0
        %2326 = vmatpush1.bf16.msra.mxu0 %v2308
        %2327 = vmatprep.subr.bf16.mxu0 0
        %2328 = vmatpush1.bf16.msra.mxu0 %v2309
        %2329 = vmatprep.subr.bf16.mxu0 0
        %2330 = vmatpush1.bf16.msra.mxu0 %v2310
        %2331 = vmatprep.subr.bf16.mxu0 0
        %2332 = vmatpush1.bf16.msra.mxu0 %v2311
        %2333 = vmatprep.subr.bf16.mxu0 0
        %2334 = vmatpush1.bf16.msra.mxu0 %v2312
        %2335 = vmatprep.subr.bf16.mxu0 0
        %2336 = vmatpush1.bf16.msra.mxu0 %v2313
        %2337 = vmatprep.subr.bf16.mxu0 0
        %2338 = vmatpush1.bf16.msra.mxu0 %v2314
        %2339 = vmatprep.subr.bf16.mxu0 0
        %2340 = vmatpush1.bf16.msra.mxu0 0
        %2341 = vmatprep.subr.bf16.mxu0 0
        %2342 = vmatpush1.bf16.msra.mxu0 0
        %2343 = vmatprep.subr.bf16.mxu0 0
        %2344 = vmatpush1.bf16.msra.mxu0 0
        %2345 = vmatprep.subr.bf16.mxu0 0
        %2346 = vmatpush1.bf16.msra.mxu0 0
        %2347 = vmatprep.subr.bf16.mxu0 0
        %2348 = vmatpush1.bf16.msra.mxu0 0
        %2349 = vmatprep.subr.bf16.mxu0 0
        %2350 = vmatpush1.bf16.msra.mxu0 0
        %2351 = vmatprep.subr.bf16.mxu0 0
        %2352 = vmatpush1.bf16.msra.mxu0 0
        %2353 = vmatprep.subr.bf16.mxu0 0
        %2354 = vmatpush1.bf16.msra.mxu0 0
        %2355 = vmatprep.mubr.bf16.mxu0 0
        %2356 = vmatmul.mubr.bf16.gmra.mrb[0].mxu0 %v2250
        %v2357 = vpop.f32.mrb[0].mxu0
        %v2358 = vadd.f32 %v2273, %v2357
        %v2359 = vpop.f32.mrb[0].mxu0
        %v2360 = vpop.f32.mrb[0].mxu0
        %v2361 = vadd.f32 %v2273, %v2360
        %v2362 = vpop.f32.mrb[0].mxu0
        %2363 = vmatprep.mubr.bf16.mxu0 0
        %2364 = vmatmul.mubr.bf16.gmra.mrb[0].mxu0 %v2251
        %v2365 = vpop.f32.mrb[0].mxu0
        %v2366 = vadd.f32 %v2273, %v2365
        %v2367 = vpop.f32.mrb[0].mxu0
        %v2368 = vpop.f32.mrb[0].mxu0
        %v2369 = vadd.f32 %v2273, %v2368
        %v2370 = vpop.f32.mrb[0].mxu0
        %2371 = vdwg.mxu0
        %2372 = vmax.xlane.f32.xlu0 %v2358
        %v2373 = vpop.xlane.xlu0 %2372
        %2374 = vmax.xlane.f32.xlu0 %v2361
        %v2375 = vpop.xlane.xlu0 %2374
        %2376 = vmax.xlane.f32.xlu0 %v2366
        %v2377 = vpop.xlane.xlu0 %2376
        %2378 = vmax.xlane.f32.xlu0 %v2369
        %v2379 = vpop.xlane.xlu0 %2378
        %v2380 = vsub.f32 %v2358, %v2373
        %v2381 = vsub.f32 %v2361, %v2375
        %v2382 = vsub.f32 %v2366, %v2377
        %v2383 = vsub.f32 %v2369, %v2379
        %v2384 = vmul.f32 %v2380, 1.442695
        %v2385 = vpow.pop %v2384
        %v2386 = vmul.f32 %v2381, 1.442695
        %v2387 = vpow.pop %v2386
        %v2388 = vmul.f32 %v2382, 1.442695
        %v2389 = vpow.pop %v2388
        %v2390 = vmul.f32 %v2383, 1.442695
        %v2391 = vpow.pop %v2390
        %2392 = vadd.xlane.f32.xlu0 %v2385
        %v2393 = vpop.xlane.xlu0 %2392
        %2394 = vadd.xlane.f32.xlu0 %v2387
        %v2395 = vpop.xlane.xlu0 %2394
        %2396 = vadd.xlane.f32.xlu0 %v2389
        %v2397 = vpop.xlane.xlu0 %2396
        %2398 = vadd.xlane.f32.xlu0 %v2391
        %v2399 = vpop.xlane.xlu0 %2398
        %v2400 = vlog2.pop %v2393
        %v2401 = vmul.f32 %v2400, 0.6931472
        %v2402 = vlog2.pop %v2395
        %v2403 = vmul.f32 %v2402, 0.6931472
        %v2404 = vlog2.pop %v2397
        %v2405 = vmul.f32 %v2404, 0.6931472
        %v2406 = vlog2.pop %v2399
        %v2407 = vmul.f32 %v2406, 0.6931472
        %v2408 = vsub.f32 %v2380, %v2401
        %v2409 = vsub.f32 %v2381, %v2403
        %v2410 = vsub.f32 %v2382, %v2405
        %v2411 = vsub.f32 %v2383, %v2407
        %2412 = vst [vmem:[%s541] sm:$0xff] %v2408
        %2413 = vst [vmem:[%s541 + $0x8] sm:$0xff] %v2409
        %2414 = vst [vmem:[%s541 + $0x10] sm:$0xff] %v2410
        %2415 = vst [vmem:[%s541 + $0x18] sm:$0xff] %v2411
        %s2416 = sand.u32 %s287, 1
        %s2417 = scalar_lea.sflag [#allocation4], %s2416
        %s2418 = sand.u32 %s287, 1
        %s2419 = smul.addr %s2418, 32
        %s2420 = scalar_lea.vmem [#allocation14], %s2419
        // Predicated region
        $region93: #{tpu_custom_call.1} parent=63 // pred_check
          %p2421 = pneg %p297
        $region94: #{tpu_custom_call.1} parent=63 // pred_check_branch
          %2423 = sbr.rel (%p2421) target = $region96
        $region95: #{tpu_custom_call.1} parent=63 // pred_region
          %s2424 = smul.u32 4, %s33
          %s2426 = ssub.s32 512, 512
          %2427 = vsyncadd %s2417, %s2426
          %s2428 = smul.addr %s2424, 128
          %s2429 = scalar_lea.hbm %s11, %s2428
          %s2430 = sshll.u32 %s2420, 4
          %s2431 = int_to_ptr.vmem [resolvable:$true] %s2430
          %2436 = dma.vmem_to_hbm [thread:$0]  %s2431, 512, %s2429, %s2417, 128, 128, 8
        $region96: #{tpu_custom_call.1} parent=63 // pred_fallthru
          _
      $region64: #{tpu_custom_call.1} parent=5 // pred_fallthru
        _
      %p2437 = scmp.le.s32.totalorder 2, %s28
      // Predicated region
      $region97: #{tpu_custom_call.1} parent=5 // pred_check
        %p2438 = pneg %p2437
      $region98: #{tpu_custom_call.1} parent=5 // pred_check_branch
        %2440 = sbr.rel (%p2438) target = $region100
      $region99: #{tpu_custom_call.1} parent=5 // pred_region
        %s2441 = ssub.s32 %s28, 2
        // Predicated region
        $region101: #{tpu_custom_call.1} parent=99 // pred_check
          %p2442 = pneg %p303
        $region102: #{tpu_custom_call.1} parent=99 // pred_check_branch
          %2444 = sbr.rel (%p2442) target = $region104
        $region103: #{tpu_custom_call.1} parent=99 // pred_region
          %s2445 = sand.u32 %s288, 1
          %s2446 = scalar_lea.sflag [#allocation4], %s2445
          %s2447 = sand.u32 %s288, 1
          %s2448 = smul.addr %s2447, 32
          %s2449 = scalar_lea.vmem [#allocation14], %s2448
          %2450 = dma.done %s2446, 512
        $region104: #{tpu_custom_call.1} parent=99 // pred_fallthru
          _
      $region100: #{tpu_custom_call.1} parent=5 // pred_fallthru
        _
    $region6: #{tpu_custom_call.1} parent=1 // loop_footer
      %s32 = sadd.s32 1, %s28
    $region7: #{tpu_custom_call.1} parent=1 // loop_footer_branch
      %27 = sbr.rel target = $region3
    $region8: #{tpu_custom_call.1} parent=1 // loop_exit
      _
    %2451 = vsyncpa [#allocation3], 1
    %s2452 = scalar_lea.sflag [#allocation3], 1
    %2453 = vsyncpa %s2452, 1
    %2454 = vsyncpa [#allocation6], 1
    %s2455 = scalar_lea.sflag [#allocation6], 1
    %2456 = vsyncpa %s2455, 1
    %2457 = vsyncpa [#allocation9], 1
    %2458 = vsyncpa [#allocation12], 1
    %2459 = vsyncpa [#allocation4], 1
    %s2460 = scalar_lea.sflag [#allocation4], 1
    %2461 = vsyncpa %s2460, 1

</llo_original>
